<compile_context>
chip_gen: v5e
topology: v5e:2x2
jax: 0.10.0
libtpu: 0.0.40
codegen_flags: <defaults>
</compile_context>

<pallas_src>
import functools
import math

import jax
import jax.numpy as jnp
from jax import lax
from jax.experimental import pallas as pl
from jax.experimental.pallas import tpu as pltpu

_LANE = 128


def _round_up(x: int, m: int) -> int:
    return (x + m - 1) // m * m


def _cdiv(a: int, b: int) -> int:
    return (a + b - 1) // b


def _default_budgets():
    """(max_tile_bytes, vmem_limit_bytes) per TPU generation; conservative fallback."""
    try:
        kind = jax.devices()[0].device_kind.lower()
    except Exception:
        kind = ""
    if "v7" in kind:   # 64 MiB VMEM per TC, 3.2 TB/s HBM
        return 12 * 1024 * 1024, 44 * 1024 * 1024
    if "v6" in kind:   # 128 MiB VMEM
        return 16 * 1024 * 1024, 64 * 1024 * 1024
    return 8 * 1024 * 1024, 32 * 1024 * 1024   # v5e / unknown


def _choose_tiles(B, D, *, max_tb, max_tk, max_tile_bytes, itemsize, min_b_tiles=2):
    """Pick (tb, tk, nk): batch tile, feature tile, number of feature blocks."""
    d128 = _round_up(max(D, 1), _LANE)
    max_tk = max(_LANE, (max_tk // _LANE) * _LANE)
    max_tb = max(_LANE, (max_tb // _LANE) * _LANE)

    # Feature blocks: equal 128-aligned chunks no larger than max_tk.
    nk = max(1, _cdiv(d128, max_tk))
    tk = _round_up(_cdiv(d128, nk), _LANE)
    nk = _cdiv(d128, tk)          # re-derive so the last block is never empty

    # Batch tile: multiple of 128 within the per-tile byte budget; balanced so
    # over-fetch is < 128 rows; keep >= min_b_tiles tiles (when B allows) so
    # v7x's two TensorCores both get work.
    row_bytes = tk * itemsize
    cap = max(_LANE, min(max_tb, (max_tile_bytes // row_bytes) // _LANE * _LANE))
    ntb = max(_cdiv(B, cap), min(min_b_tiles, _cdiv(B, _LANE)))
    tb = _round_up(_cdiv(B, ntb), _LANE)
    return tb, tk, nk


def _partial_lane_sums(x_ref, w_ref, tk, base, d_total):
    """(tb, 128) f32 per-lane partial sums of x_block * w_block.

    `base` is the static starting column of this feature block when the block
    extends past `d_total` (out-of-bounds lanes must be masked), or None when
    the block is fully in bounds (pure VPU mul+add, no masking).
    """
    tb = x_ref.shape[0]
    acc = jnp.zeros((tb, _LANE), jnp.float32)
    for c in range(tk // _LANE):
        lo = None if base is None else base + c * _LANE
        if lo is not None and lo >= d_total:
            continue                       # chunk entirely out of bounds
        xc = x_ref[:, c * _LANE:(c + 1) * _LANE].astype(jnp.float32)
        wc = w_ref[:, c * _LANE:(c + 1) * _LANE].astype(jnp.float32)
        if lo is not None and lo + _LANE > d_total:
            cols = lo + lax.broadcasted_iota(jnp.int32, (1, _LANE), 1)
            xc = jnp.where(cols < d_total, xc, jnp.float32(0.0))
        acc = acc + xc * wc
    return acc


def _linear_probe_kernel_single(x_ref, w_ref, b_ref, o_ref, *, tk, d_total):
    # Specialized nk == 1 body: no accumulator scratch, no init/finalize.
    ragged = tk > d_total
    part = _partial_lane_sums(x_ref, w_ref, tk, 0 if ragged else None, d_total)
    row = jnp.sum(part, axis=1).reshape(1, -1)        # one XLU reduce + relayout
    o_ref[...] = (row + b_ref[0, 0]).astype(o_ref.dtype)


def _linear_probe_kernel_multi(x_ref, w_ref, b_ref, o_ref, acc_ref, *, tk, d_total, nk):
    k = pl.program_id(1)
    last_base = (nk - 1) * tk
    ragged = nk * tk > d_total

    def step(base):
        part = _partial_lane_sums(x_ref, w_ref, tk, base, d_total)

        @pl.when(k == 0)
        def _():
            acc_ref[...] = part

        @pl.when(k > 0)
        def _():
            acc_ref[...] += part

    if not ragged:
        step(None)
    else:
        @pl.when(k < nk - 1)
        def _():
            step(None)

        @pl.when(k == nk - 1)
        def _():
            step(last_base)

    @pl.when(k == nk - 1)
    def _():
        row = jnp.sum(acc_ref[...], axis=1).reshape(1, -1)   # once per batch tile
        o_ref[...] = (row + b_ref[0, 0]).astype(o_ref.dtype)


def _linear_probe_pallas(x, weight, bias, *, max_tb, max_tk,
                         max_tile_bytes=None, vmem_limit_bytes=None):
    B, D = x.shape
    def_tile, def_vmem = _default_budgets()
    if max_tile_bytes is None:
        max_tile_bytes = def_tile
    if vmem_limit_bytes is None:
        vmem_limit_bytes = def_vmem

    tb, tk, nk = _choose_tiles(B, D, max_tb=max_tb, max_tk=max_tk,
                               max_tile_bytes=max_tile_bytes,
                               itemsize=jnp.dtype(x.dtype).itemsize)
    nb = _cdiv(B, tb)
    Dp = nk * tk

    # Only the tiny (1, D) weight is padded; x streams untouched from HBM.
    wf = jnp.asarray(weight, jnp.float32).reshape(1, D)
    if Dp != D:
        wf = jnp.pad(wf, ((0, 0), (0, Dp - D)))
    b2 = jnp.asarray(bias, jnp.float32).reshape(1, 1)

    if nk == 1:
        kernel = functools.partial(_linear_probe_kernel_single, tk=tk, d_total=D)
        scratch = []
    else:
        kernel = functools.partial(_linear_probe_kernel_multi, tk=tk, d_total=D, nk=nk)
        scratch = [pltpu.VMEM((tb, _LANE), jnp.float32)]

    out = pl.pallas_call(
        kernel,
        out_shape=jax.ShapeDtypeStruct((1, B), jnp.float32),
        grid_spec=pltpu.PrefetchScalarGridSpec(
            num_scalar_prefetch=0,
            grid=(nb, nk),
            in_specs=[
                pl.BlockSpec((tb, tk), lambda i, k: (i, k)),          # x stream
                pl.BlockSpec((1, tk), lambda i, k: (0, k)),           # weight row
                pl.BlockSpec(memory_space=pltpu.MemorySpace.SMEM),    # bias scalar
            ],
            out_specs=pl.BlockSpec((1, tb), lambda i, k: (0, i)),     # lane-dense row
            scratch_shapes=scratch,
        ),
        compiler_params=pltpu.CompilerParams(
            dimension_semantics=("parallel", "arbitrary"),
            vmem_limit_bytes=vmem_limit_bytes,
        ),
    )(x, wf, b2)

    return out.reshape(B, 1)


def _linear_probe_xla(x, weight, bias):
    w = jnp.asarray(weight, jnp.float32).reshape(1, -1)
    b = jnp.asarray(bias, jnp.float32).reshape(1)
    return jnp.dot(x.astype(jnp.float32), w.T,
                   preferred_element_type=jnp.float32) + b


def linear_probe(x, weight, bias, *, min_batch_for_kernel=4096, force_kernel=False,
                 max_tb=2048, max_tk=2048, max_tile_bytes=None, vmem_limit_bytes=None):
    """Equivalent to torch nn.Linear(D, 1): x (..., D), weight (1, D), bias (1,).

    Small batches take the plain-XLA path (kernel launch cost dominates);
    large batches stream through the Pallas kernel.
    """
    *lead, D = x.shape
    B = int(math.prod(lead)) if lead else 1
    x2 = x.reshape(B, D)
    if force_kernel or B >= min_batch_for_kernel:
        out = _linear_probe_pallas(x2, weight, bias, max_tb=max_tb, max_tk=max_tk,
                                   max_tile_bytes=max_tile_bytes,
                                   vmem_limit_bytes=vmem_limit_bytes)
    else:
        out = _linear_probe_xla(x2, weight, bias)
    return out.reshape(*lead, 1)


if __name__ == "__main__":
    key = jax.random.PRNGKey(0)
    kx, kw, kb, kx2, kw2 = jax.random.split(key, 5)

    # 1) Module-sized input (batch=8, input_size=128): tiny-batch XLA path.
    B, D = 8, 128
    bound = 1.0 / (D ** 0.5)
    x = jax.random.normal(kx, (B, D), dtype=jnp.float32)
    weight = jax.random.uniform(kw, (1, D), minval=-bound, maxval=bound,
                                dtype=jnp.float32)
    bias = jax.random.uniform(kb, (1,), minval=-bound, maxval=bound,
                              dtype=jnp.float32)

    out_small = linear_probe(x, weight, bias)
    jax.block_until_ready(out_small)
    ref_small = x @ weight.T + bias
    assert out_small.shape == (B, 1)
    assert jnp.allclose(out_small, ref_small, atol=1e-5, rtol=1e-5)

    # 2) Pallas kernel, single feature block (nk == 1): ragged B and D with NO
    #    wrapper padding of x — exercises partial edge blocks, the in-kernel
    #    feature-lane mask and the lane-dense (1, tb) output.
    Bk, Dk = 300, 300
    xk = jax.random.normal(kx2, (Bk, Dk), dtype=jnp.float32)
    wk = jax.random.uniform(kw2, (1, Dk), minval=-bound, maxval=bound,
                            dtype=jnp.float32)
    ref_k = xk @ wk.T + bias

    out_1 = linear_probe(xk, wk, bias, force_kernel=True)
    jax.block_until_ready(out_1)
    assert out_1.shape == (Bk, 1)
    assert jnp.allclose(out_1, ref_k, atol=1e-4, rtol=1e-4)

    # 3) Pallas kernel, multiple feature blocks (nk > 1): exercises the
    #    (tb, 128) f32 VMEM accumulator, masked last feature block and the
    #    partial batch tail.
    out_2 = linear_probe(xk, wk, bias, force_kernel=True, max_tb=128, max_tk=128)
    jax.block_until_ready(out_2)
    assert out_2.shape == (Bk, 1)
    assert jnp.allclose(out_2, ref_k, atol=1e-4, rtol=1e-4)

    print("KERNEL_OK")
</pallas_src>

<mosaic_0001>
module attributes {stable_mosaic.version = 11 : i64} {
  func.func @_linear_probe_kernel_single(%arg0: i32, %arg1: i32, %arg2: memref<256x384xf32, #tpu.memory_space<vmem>>, %arg3: memref<1x384xf32, #tpu.memory_space<vmem>>, %arg4: memref<1x1xf32, #tpu.memory_space<smem>>, %arg5: memref<1x256xf32, #tpu.memory_space<vmem>>) attributes {dimension_semantics = [#tpu.dimension_semantics<parallel>, #tpu.dimension_semantics<arbitrary>], iteration_bounds = array<i64: 2, 1>, scalar_prefetch = 0 : i64, scratch_operands = 0 : i64, tpu.core_type = #tpu.core_type<tc>, window_params = [{transform_indices = @transform_0, window_bounds = array<i64: 256, 384>}, {transform_indices = @transform_1, window_bounds = array<i64: 1, 384>}, {transform_indices = @transform_2, window_bounds = array<i64: 1, 1>}, {transform_indices = @transform_3, window_bounds = array<i64: 1, 256>}]} {
    %cst = arith.constant 0.000000e+00 : f32
    %0 = vector.broadcast %cst : f32 to vector<256x128xf32>
    %c0 = arith.constant 0 : index
    %c0_0 = arith.constant 0 : index
    %1 = vector.load %arg2[%c0, %c0_0] : memref<256x384xf32, #tpu.memory_space<vmem>>, vector<256x128xf32>
    %c0_1 = arith.constant 0 : index
    %c0_2 = arith.constant 0 : index
    %2 = vector.load %arg3[%c0_1, %c0_2] : memref<1x384xf32, #tpu.memory_space<vmem>>, vector<1x128xf32>
    %3 = vector.broadcast %2 : vector<1x128xf32> to vector<256x128xf32>
    %4 = arith.mulf %1, %3 : vector<256x128xf32>
    %5 = arith.addf %0, %4 : vector<256x128xf32>
    %c0_3 = arith.constant 0 : index
    %c128 = arith.constant 128 : index
    %6 = vector.load %arg2[%c0_3, %c128] : memref<256x384xf32, #tpu.memory_space<vmem>>, vector<256x128xf32>
    %c0_4 = arith.constant 0 : index
    %c128_5 = arith.constant 128 : index
    %7 = vector.load %arg3[%c0_4, %c128_5] : memref<1x384xf32, #tpu.memory_space<vmem>>, vector<1x128xf32>
    %8 = vector.broadcast %7 : vector<1x128xf32> to vector<256x128xf32>
    %9 = arith.mulf %6, %8 : vector<256x128xf32>
    %10 = arith.addf %5, %9 : vector<256x128xf32>
    %c0_6 = arith.constant 0 : index
    %c256 = arith.constant 256 : index
    %11 = vector.load %arg2[%c0_6, %c256] : memref<256x384xf32, #tpu.memory_space<vmem>>, vector<256x128xf32>
    %c0_7 = arith.constant 0 : index
    %c256_8 = arith.constant 256 : index
    %12 = vector.load %arg3[%c0_7, %c256_8] : memref<1x384xf32, #tpu.memory_space<vmem>>, vector<1x128xf32>
    %13 = tpu.iota {dimensions = array<i32: 1>} : vector<1x128xi32>
    %c256_i32 = arith.constant 256 : i32
    %14 = vector.broadcast %c256_i32 : i32 to vector<1x128xi32>
    %15 = arith.addi %14, %13 : vector<1x128xi32>
    %c300_i32 = arith.constant 300 : i32
    %16 = vector.broadcast %c300_i32 : i32 to vector<1x128xi32>
    %17 = arith.cmpi slt, %15, %16 : vector<1x128xi32>
    %cst_9 = arith.constant 0.000000e+00 : f32
    %18 = vector.shape_cast %17 : vector<1x128xi1> to vector<1x128xi1>
    %19 = vector.broadcast %18 : vector<1x128xi1> to vector<256x128xi1>
    %20 = vector.broadcast %cst_9 : f32 to vector<256x128xf32>
    %21 = arith.select %19, %11, %20 : vector<256x128xi1>, vector<256x128xf32>
    %22 = vector.broadcast %12 : vector<1x128xf32> to vector<256x128xf32>
    %23 = arith.mulf %21, %22 : vector<256x128xf32>
    %24 = arith.addf %10, %23 : vector<256x128xf32>
    %cst_10 = arith.constant dense<0.000000e+00> : vector<256xf32>
    %25 = vector.multi_reduction <add>, %24, %cst_10 [1] : vector<256x128xf32> to vector<256xf32>
    %26 = vector.shape_cast %25 : vector<256xf32> to vector<1x256xf32>
    %c0_11 = arith.constant 0 : index
    %c0_12 = arith.constant 0 : index
    %27 = memref.load %arg4[%c0_11, %c0_12] : memref<1x1xf32, #tpu.memory_space<smem>>
    %28 = vector.broadcast %27 : f32 to vector<1x256xf32>
    %29 = arith.addf %26, %28 : vector<1x256xf32>
    %c0_13 = arith.constant 0 : index
    %c0_14 = arith.constant 0 : index
    %30 = vector.load %arg5[%c0_13, %c0_14] : memref<1x256xf32, #tpu.memory_space<vmem>>, vector<1x256xf32>
    tpu.vector_store %arg5[%c0_13, %c0_14], %29 {strides = array<i32>} : memref<1x256xf32, #tpu.memory_space<vmem>>, vector<1x256xf32>,
    return
  }
  func.func @transform_0(%arg0: i32, %arg1: i32) -> (i32, i32) {
    %c0_i32 = arith.constant 0 : i32
    return %arg0, %arg1 : i32, i32
  }
  func.func @transform_1(%arg0: i32, %arg1: i32) -> (i32, i32) {
    %c0_i32 = arith.constant 0 : i32
    %c0_i32_0 = arith.constant 0 : i32
    return %c0_i32, %arg1 : i32, i32
  }
  func.func @transform_2(%arg0: i32, %arg1: i32) -> (i32, i32) {
    %c0_i32 = arith.constant 0 : i32
    %c0_i32_0 = arith.constant 0 : i32
    %c0_i32_1 = arith.constant 0 : i32
    return %c0_i32, %c0_i32_0 : i32, i32
  }
  func.func @transform_3(%arg0: i32, %arg1: i32) -> (i32, i32) {
    %c0_i32 = arith.constant 0 : i32
    %c0_i32_0 = arith.constant 0 : i32
    return %c0_i32, %arg0 : i32, i32
  }
}

</mosaic_0001>

<llo_original>
// kernel: tpu_custom_call.1
$region0: #{tpu_custom_call.1}
  #allocation0 [shape = 'u32[]', space=smem, size = 0x4, offset = 0x4, fixed_abs, tag = 'smem constant byte address 0x4 - core index']
  #allocation1 [shape = 'u32[72,128]{1,0:T(1,128)}', space=vmem, size = 0x9000, scoped, tag = 'internal scratch']
  #allocation2 [shape = 'f32[1,1]{1,0:T(1,128)S(6)}', space=smem, size = 0x200, scoped, tag = 'scoped memory for tpu_custom_call.1']
  %s0 = inlined_call_operand.hbm [shape: f32[300,300], index: 0, kind: input, shape index: {}]
  %s1 = inlined_call_operand.hbm [shape: f32[1,384], index: 1, kind: input, shape index: {}]
  %s2 = inlined_call_operand.<no memory space> [shape: f32[1,1], index: 2, kind: input, shape index: {}]
  %s3 = inlined_call_operand.hbm [shape: f32[1,300], index: 3, kind: output, shape index: {}]
  %s4 = sld [smem:[#allocation0]]
  $region53: #{tpu_custom_call.1} parent=0
    _
  %s6 = ssub.s32 1, %s4
  %s7 = scalar_select 0, %s6, %s4
  %8 = sst [smem:[#allocation2]] %s2
  $region1: #{tpu_custom_call.1} parent=0
    #allocation3 [shape = 'u8[786432]{0}', space=vmem, size = 0xc0000, scoped, tag = 'input window, operand 0']
    #allocation4 [shape = 's32[2]{0}', space=sflag, size = 0x8, scoped, tag = 'scoped memory for tpu_custom_call.1']
    #allocation5 [shape = 's32[2]{0}', space=sflag, size = 0x8, scoped, tag = 'scoped memory for tpu_custom_call.1']
    #allocation6 [shape = 'u8[1536]{0}', space=vmem, size = 0x800, scoped, tag = 'input window, operand 1, single buffered']
    #allocation7 [shape = 's32[1]{0}', space=sflag, size = 0x4, scoped, tag = 'scoped memory for tpu_custom_call.1']
    #allocation8 [shape = 'u8[2048]{0}', space=vmem, size = 0x800, scoped, tag = 'output window, operand 0']
    %9 = vsyncpa [#allocation4], 0
    %s10 = scalar_lea.sflag [#allocation4], 1
    %11 = vsyncpa %s10, 0
    %12 = vsyncpa [#allocation7], 0
    %13 = vsyncpa [#allocation5], 0
    %s14 = scalar_lea.sflag [#allocation5], 1
    %15 = vsyncpa %s14, 0
    loop: start=0, step=1, limit=4
    $region2: #{tpu_custom_call.1} parent=1 // loop_pre_header
      _
    $region3: #{tpu_custom_call.1} parent=1 // loop_header
      %s17 = sphi 0, %s21
      %p18 = scmp.ge.s32.totalorder %s17, 4
      %s24 = sphi 0, %s36
      %s25 = sphi 0, %s32
      %s26 = sphi 0, %s24
      %s27 = sphi 0, %s25
      %s28 = sphi 0, %s26
      %s29 = sphi 0, %s27
      %s41 = sphi 0, %s43
      %s44 = sphi 0, %s41
      %s45 = sphi 0, %s44
      %s61 = sphi 0, %s45
      %s67 = sphi 0, %s69
      %s70 = sphi 0, %s67
      %s71 = sphi 0, %s70
      %s87 = sphi 0, %s71
      %s91 = sphi 0, %s91
      %s93 = sphi 0, %s91
      %s94 = sphi 0, %s93
      %s108 = sphi 0, %s94
      %s114 = sphi 0, %s116
      %s117 = sphi 0, %s114
      %s118 = sphi 0, %s117
      %s134 = sphi 0, %s118
    $region4: #{tpu_custom_call.1} parent=1 // loop_header_branch
      %20 = sbr.rel (%p18) target = $region8
    $region5: #{tpu_custom_call.1} parent=1 // loop_body
      %s22 = ssub.s32 %s17, 1
      %s23 = ssub.s32 %s17, 2
      %s30 = sadd.s32 1, %s25
      %p31 = scmp.ge.s32.totalorder %s30, 1
      %s32 = scalar_select %p31, 0, %s30
      %s33 = sadd.s32 1, %s24
      %s34 = scalar_select %p31, %s33, %s24
      %p35 = scmp.ge.s32.totalorder %s34, 2
      %s36 = scalar_select %p35, 0, %s34
      %s37 = ssub.s32 %s24, %s36
      %s38 = ssub.s32 %s25, %s32
      %s39 = sor.u32 %s37, %s38
      %p40 = scmp.eq.s32.totalorder %s39, 0
      %s42 = sadd.s32 %s41, 1
      %s43 = scalar_select %p40, %s41, %s42
      %p46 = pneg %p40
      %p47 = scmp.eq.s32.totalorder %s17, 1
      %p48 = por %p46, %p47
      %p49 = scmp.ne.s32.totalorder %s41, %s44
      %p50 = scmp.eq.s32.totalorder %s17, 0
      %p51 = por %p49, %p50
      %p52 = scmp.ne.s32.totalorder %s41, %s44
      %p53 = scmp.eq.s32.totalorder %s22, 1
      %p54 = por %p52, %p53
      %p55 = scmp.ne.s32.totalorder %s44, %s45
      %p56 = scmp.eq.s32.totalorder %s22, 0
      %p57 = por %p55, %p56
      %p58 = scmp.ne.s32.totalorder %s44, %s45
      %p59 = scmp.eq.s32.totalorder %s23, 1
      %p60 = por %p58, %p59
      %p62 = scmp.ne.s32.totalorder %s45, %s61
      %p63 = scmp.eq.s32.totalorder %s23, 0
      %p64 = por %p62, %p63
      %s65 = ssub.s32 %s25, %s32
      %p66 = scmp.eq.s32.totalorder %s65, 0
      %s68 = sadd.s32 %s67, 1
      %s69 = scalar_select %p66, %s67, %s68
      %p72 = pneg %p66
      %p73 = scmp.eq.s32.totalorder %s17, 1
      %p74 = por %p72, %p73
      %p75 = scmp.ne.s32.totalorder %s67, %s70
      %p76 = scmp.eq.s32.totalorder %s17, 0
      %p77 = por %p75, %p76
      %p78 = scmp.ne.s32.totalorder %s67, %s70
      %p79 = scmp.eq.s32.totalorder %s22, 1
      %p80 = por %p78, %p79
      %p81 = scmp.ne.s32.totalorder %s70, %s71
      %p82 = scmp.eq.s32.totalorder %s22, 0
      %p83 = por %p81, %p82
      %p84 = scmp.ne.s32.totalorder %s70, %s71
      %p85 = scmp.eq.s32.totalorder %s23, 1
      %p86 = por %p84, %p85
      %p88 = scmp.ne.s32.totalorder %s71, %s87
      %p89 = scmp.eq.s32.totalorder %s23, 0
      %p90 = por %p88, %p89
      %s92 = sadd.s32 %s91, 1
      %p95 = scmp.eq.s32.totalorder %s17, 1
      %p96 = scmp.ne.s32.totalorder %s91, %s93
      %p97 = scmp.eq.s32.totalorder %s17, 0
      %p98 = por %p96, %p97
      %p99 = scmp.ne.s32.totalorder %s91, %s93
      %p100 = scmp.eq.s32.totalorder %s22, 1
      %p101 = por %p99, %p100
      %p102 = scmp.ne.s32.totalorder %s93, %s94
      %p103 = scmp.eq.s32.totalorder %s22, 0
      %p104 = por %p102, %p103
      %p105 = scmp.ne.s32.totalorder %s93, %s94
      %p106 = scmp.eq.s32.totalorder %s23, 1
      %p107 = por %p105, %p106
      %p109 = scmp.ne.s32.totalorder %s94, %s108
      %p110 = scmp.eq.s32.totalorder %s23, 0
      %p111 = por %p109, %p110
      %s112 = ssub.s32 %s24, %s36
      %p113 = scmp.eq.s32.totalorder %s112, 0
      %s115 = sadd.s32 %s114, 1
      %s116 = scalar_select %p113, %s114, %s115
      %p119 = pneg %p113
      %p120 = scmp.eq.s32.totalorder %s17, 1
      %p121 = por %p119, %p120
      %p122 = scmp.ne.s32.totalorder %s114, %s117
      %p123 = scmp.eq.s32.totalorder %s17, 0
      %p124 = por %p122, %p123
      %p125 = scmp.ne.s32.totalorder %s114, %s117
      %p126 = scmp.eq.s32.totalorder %s22, 1
      %p127 = por %p125, %p126
      %p128 = scmp.ne.s32.totalorder %s117, %s118
      %p129 = scmp.eq.s32.totalorder %s22, 0
      %p130 = por %p128, %p129
      %p131 = scmp.ne.s32.totalorder %s117, %s118
      %p132 = scmp.eq.s32.totalorder %s23, 1
      %p133 = por %p131, %p132
      %p135 = scmp.ne.s32.totalorder %s118, %s134
      %p136 = scmp.eq.s32.totalorder %s23, 0
      %p137 = por %p135, %p136
      %p138 = scmp.le.s32.totalorder 1, %s17
      %p139 = scmp.lt.s32.totalorder %s17, 3
      %p140 = pnand %p138, %p139
      %p141 = pneg %p140
      // Predicated region
      $region9: #{tpu_custom_call.1} parent=5 // pred_check
        _
      $region10: #{tpu_custom_call.1} parent=5 // pred_check_branch
        %143 = sbr.rel (%p140) target = $region12
      $region11: #{tpu_custom_call.1} parent=5 // pred_region
        %s144 = ssub.s32 %s17, 1
        // Predicated region
        $region13: #{tpu_custom_call.1} parent=11 // pred_check
          %p145 = pneg %p83
        $region14: #{tpu_custom_call.1} parent=11 // pred_check_branch
          %147 = sbr.rel (%p145) target = $region16
        $region15: #{tpu_custom_call.1} parent=11 // pred_region
          %s148 = smul.u32 3, %s27
          %150 = vsyncadd [#allocation7], 0
          %s151 = scalar_lea.hbm %s1, %s148
          %s153 = sshll.u32 %s151, 4
          %s154 = int_to_ptr.hbm [resolvable:$true] %s153
          %s155 = sshll.u32 [#allocation6], 4
          %s156 = int_to_ptr.vmem [resolvable:$true] %s155
          %158 = dma.hbm_to_vmem [thread:$0]  %s154, 48, %s156, [#allocation7]
        $region16: #{tpu_custom_call.1} parent=11 // pred_fallthru
          _
        // Predicated region
        $region17: #{tpu_custom_call.1} parent=11 // pred_check
          %p159 = pneg %p104
        $region18: #{tpu_custom_call.1} parent=11 // pred_check_branch
          %161 = sbr.rel (%p159) target = $region20
        $region19: #{tpu_custom_call.1} parent=11 // pred_region
          _
        $region20: #{tpu_custom_call.1} parent=11 // pred_fallthru
          _
      $region12: #{tpu_custom_call.1} parent=5 // pred_fallthru
        _
      %p162 = scmp.lt.s32.totalorder %s17, 2
      // Predicated region
      $region21: #{tpu_custom_call.1} parent=5 // pred_check
        %p163 = pneg %p162
      $region22: #{tpu_custom_call.1} parent=5 // pred_check_branch
        %165 = sbr.rel (%p163) target = $region24
      $region23: #{tpu_custom_call.1} parent=5 // pred_region
        // Predicated region
        $region25: #{tpu_custom_call.1} parent=23 // pred_check
          %p166 = pneg %p51
        $region26: #{tpu_custom_call.1} parent=23 // pred_check_branch
          %168 = sbr.rel (%p166) target = $region28
        $region27: #{tpu_custom_call.1} parent=23 // pred_region
          %s169 = sand.u32 %s41, 1
          %s170 = scalar_lea.sflag [#allocation4], %s169
          %s171 = sand.u32 %s41, 1
          %s172 = smul.addr %s171, 768
          %s173 = scalar_lea.vmem [#allocation3], %s172
          %s174 = smul.u32 32, %s24
          %s175 = smul.u32 3, %s25
          %s176 = ssub.s32 38, %s174
          %p177 = scmp.lt.s32.totalorder %s176, 32
          %s178 = scalar_select %p177, %s176, 32
          %s179 = smul.u32 8, %s178
          %s180 = smul.u32 %s179, 3
          %s181 = ssub.s32 768, %s180
          %s182 = sshll.u32 %s181, 4
          %183 = vsyncadd %s170, %s182
          %p184 = scmp.ne.s32.totalorder 0, %s180
          %s185 = smul.addr %s174, 3
          %s186 = sadd.s32 %s175, %s185
          %s187 = smul.addr %s186, 8
          %s188 = scalar_lea.hbm %s0, %s187
          %s189 = smul.u32 24, %s178
          %s190 = sshll.u32 %s188, 4
          %s191 = int_to_ptr.hbm [resolvable:$true] %s190
          %s192 = sshll.u32 %s173, 4
          %s193 = int_to_ptr.vmem [resolvable:$true] %s192
          %s194 = sshll.u32 %s189, 4
          %198 = dma.hbm_to_vmem [thread:$0]  (%p184), %s191, %s194, %s193, %s170, 384, 384, 24
        $region28: #{tpu_custom_call.1} parent=23 // pred_fallthru
          _
      $region24: #{tpu_custom_call.1} parent=5 // pred_fallthru
        _
      %p199 = scmp.le.s32.totalorder 1, %s17
      %p200 = scmp.lt.s32.totalorder %s17, 3
      %p201 = pnand %p199, %p200
      %p202 = pneg %p201
      // Predicated region
      $region29: #{tpu_custom_call.1} parent=5 // pred_check
        _
      $region30: #{tpu_custom_call.1} parent=5 // pred_check_branch
        %204 = sbr.rel (%p201) target = $region32
      $region31: #{tpu_custom_call.1} parent=5 // pred_region
        %s205 = ssub.s32 %s17, 1
        %s206 = sand.u32 %s44, 1
        %s207 = scalar_lea.sflag [#allocation4], %s206
        %s208 = sand.u32 %s44, 1
        %s209 = smul.addr %s208, 768
        %s210 = scalar_lea.vmem [#allocation3], %s209
        // Predicated region
        $region33: #{tpu_custom_call.1} parent=31 // pred_check
          %p211 = pneg %p57
        $region34: #{tpu_custom_call.1} parent=31 // pred_check_branch
          %213 = sbr.rel (%p211) target = $region36
        $region35: #{tpu_custom_call.1} parent=31 // pred_region
          %215 = dma.done %s207, 12288
        $region36: #{tpu_custom_call.1} parent=31 // pred_fallthru
          _
        // Predicated region
        $region37: #{tpu_custom_call.1} parent=31 // pred_check
          %p216 = pneg %p83
        $region38: #{tpu_custom_call.1} parent=31 // pred_check_branch
          %218 = sbr.rel (%p216) target = $region40
        $region39: #{tpu_custom_call.1} parent=31 // pred_region
          %220 = dma.done [#allocation7], 48
        $region40: #{tpu_custom_call.1} parent=31 // pred_fallthru
          _
        %s221 = sand.u32 %s44, 1
        %s222 = scalar_lea.sflag [#allocation4], %s221
        %s223 = sand.u32 %s44, 1
        %s224 = smul.addr %s223, 768
        %s225 = scalar_lea.vmem [#allocation3], %s224
        %p226 = pneg %p57
        %p227 = pneg %p54
        %p228 = pneg %p83
        %p229 = pneg %p80
        %p230 = pneg %p104
        %p231 = pneg %p101
        %p232 = pneg %p130
        %p233 = pneg %p127
        %s234 = sand.u32 %s117, 1
        %s235 = scalar_lea.sflag [#allocation5], %s234
        %s236 = sand.u32 %s117, 1
        %s237 = smul.addr %s236, 2
        %s238 = scalar_lea.vmem [#allocation8], %s237
        %s239 = smul.u32 32, %s26
        %s240 = smul.u32 3, %s27
        %s241 = ssub.s32 38, %s239
        %p242 = scmp.lt.s32.totalorder %s241, 32
        %s243 = scalar_select %p242, %s241, 32
        %s244 = smul.u32 8, %s243
        %s245 = smul.u32 %s244, 3
        %s246 = smul.u32 3, %s27
        %s247 = smul.u32 2, %s26
        %s248 = ssub.s32 3, %s247
        %p249 = scmp.lt.s32.totalorder %s248, 2
        %s250 = scalar_select %p249, %s248, 2
        %v251 = vld [vmem:[%s210] sm:$0xff]
        %v252 = vld [vmem:[%s210 + $0x18] sm:$0xff]
        %v253 = vld [vmem:[%s210 + $0x30] sm:$0xff]
        %v254 = vld [vmem:[%s210 + $0x48] sm:$0xff]
        %v255 = vld [vmem:[%s210 + $0x60] sm:$0xff]
        %v256 = vld [vmem:[%s210 + $0x78] sm:$0xff]
        %v257 = vld [vmem:[%s210 + $0x90] sm:$0xff]
        %v258 = vld [vmem:[%s210 + $0xa8] sm:$0xff]
        %v259 = vld [vmem:[%s210 + $0xc0] sm:$0xff]
        %v260 = vld [vmem:[%s210 + $0xd8] sm:$0xff]
        %v261 = vld [vmem:[%s210 + $0xf0] sm:$0xff]
        %v262 = vld [vmem:[%s210 + $0x108] sm:$0xff]
        %v263 = vld [vmem:[%s210 + $0x120] sm:$0xff]
        %v264 = vld [vmem:[%s210 + $0x138] sm:$0xff]
        %v265 = vld [vmem:[%s210 + $0x150] sm:$0xff]
        %v266 = vld [vmem:[%s210 + $0x168] sm:$0xff]
        %v267 = vld [vmem:[%s210 + $0x180] sm:$0xff]
        %v268 = vld [vmem:[%s210 + $0x198] sm:$0xff]
        %v269 = vld [vmem:[%s210 + $0x1b0] sm:$0xff]
        %v270 = vld [vmem:[%s210 + $0x1c8] sm:$0xff]
        %v271 = vld [vmem:[%s210 + $0x1e0] sm:$0xff]
        %v272 = vld [vmem:[%s210 + $0x1f8] sm:$0xff]
        %v273 = vld [vmem:[%s210 + $0x210] sm:$0xff]
        %v274 = vld [vmem:[%s210 + $0x228] sm:$0xff]
        %v275 = vld [vmem:[%s210 + $0x240] sm:$0xff]
        %v276 = vld [vmem:[%s210 + $0x258] sm:$0xff]
        %v277 = vld [vmem:[%s210 + $0x270] sm:$0xff]
        %v278 = vld [vmem:[%s210 + $0x288] sm:$0xff]
        %v279 = vld [vmem:[%s210 + $0x2a0] sm:$0xff]
        %v280 = vld [vmem:[%s210 + $0x2b8] sm:$0xff]
        %v281 = vld [vmem:[%s210 + $0x2d0] sm:$0xff]
        %v282 = vld [vmem:[%s210 + $0x2e8] sm:$0xff]
        %v283 = vld [vmem:[#allocation6] sm:$0x1]
        %v285 = vperm.slane %v283, 0
        %v287 = vmul.f32 %v251, %v285
        %v288 = vmul.f32 %v252, %v285
        %v289 = vmul.f32 %v253, %v285
        %v290 = vmul.f32 %v254, %v285
        %v291 = vmul.f32 %v255, %v285
        %v292 = vmul.f32 %v256, %v285
        %v293 = vmul.f32 %v257, %v285
        %v294 = vmul.f32 %v258, %v285
        %v295 = vmul.f32 %v259, %v285
        %v296 = vmul.f32 %v260, %v285
        %v297 = vmul.f32 %v261, %v285
        %v298 = vmul.f32 %v262, %v285
        %v299 = vmul.f32 %v263, %v285
        %v300 = vmul.f32 %v264, %v285
        %v301 = vmul.f32 %v265, %v285
        %v302 = vmul.f32 %v266, %v285
        %v303 = vmul.f32 %v267, %v285
        %v304 = vmul.f32 %v268, %v285
        %v305 = vmul.f32 %v269, %v285
        %v306 = vmul.f32 %v270, %v285
        %v307 = vmul.f32 %v271, %v285
        %v308 = vmul.f32 %v272, %v285
        %v309 = vmul.f32 %v273, %v285
        %v310 = vmul.f32 %v274, %v285
        %v311 = vmul.f32 %v275, %v285
        %v312 = vmul.f32 %v276, %v285
        %v313 = vmul.f32 %v277, %v285
        %v314 = vmul.f32 %v278, %v285
        %v315 = vmul.f32 %v279, %v285
        %v316 = vmul.f32 %v280, %v285
        %v317 = vmul.f32 %v281, %v285
        %v318 = vmul.f32 %v282, %v285
        %v319 = vadd.f32 %v287, 0.0
        %v320 = vadd.f32 %v288, 0.0
        %v321 = vadd.f32 %v289, 0.0
        %v322 = vadd.f32 %v290, 0.0
        %v323 = vadd.f32 %v291, 0.0
        %v324 = vadd.f32 %v292, 0.0
        %v325 = vadd.f32 %v293, 0.0
        %v326 = vadd.f32 %v294, 0.0
        %v327 = vadd.f32 %v295, 0.0
        %v328 = vadd.f32 %v296, 0.0
        %v329 = vadd.f32 %v297, 0.0
        %v330 = vadd.f32 %v298, 0.0
        %v331 = vadd.f32 %v299, 0.0
        %v332 = vadd.f32 %v300, 0.0
        %v333 = vadd.f32 %v301, 0.0
        %v334 = vadd.f32 %v302, 0.0
        %v335 = vadd.f32 %v303, 0.0
        %v336 = vadd.f32 %v304, 0.0
        %v337 = vadd.f32 %v305, 0.0
        %v338 = vadd.f32 %v306, 0.0
        %v339 = vadd.f32 %v307, 0.0
        %v340 = vadd.f32 %v308, 0.0
        %v341 = vadd.f32 %v309, 0.0
        %v342 = vadd.f32 %v310, 0.0
        %v343 = vadd.f32 %v311, 0.0
        %v344 = vadd.f32 %v312, 0.0
        %v345 = vadd.f32 %v313, 0.0
        %v346 = vadd.f32 %v314, 0.0
        %v347 = vadd.f32 %v315, 0.0
        %v348 = vadd.f32 %v316, 0.0
        %v349 = vadd.f32 %v317, 0.0
        %v350 = vadd.f32 %v318, 0.0
        %v351 = vld [vmem:[%s210 + $0x8] sm:$0xff]
        %v352 = vld [vmem:[%s210 + $0x20] sm:$0xff]
        %v353 = vld [vmem:[%s210 + $0x38] sm:$0xff]
        %v354 = vld [vmem:[%s210 + $0x50] sm:$0xff]
        %v355 = vld [vmem:[%s210 + $0x68] sm:$0xff]
        %v356 = vld [vmem:[%s210 + $0x80] sm:$0xff]
        %v357 = vld [vmem:[%s210 + $0x98] sm:$0xff]
        %v358 = vld [vmem:[%s210 + $0xb0] sm:$0xff]
        %v359 = vld [vmem:[%s210 + $0xc8] sm:$0xff]
        %v360 = vld [vmem:[%s210 + $0xe0] sm:$0xff]
        %v361 = vld [vmem:[%s210 + $0xf8] sm:$0xff]
        %v362 = vld [vmem:[%s210 + $0x110] sm:$0xff]
        %v363 = vld [vmem:[%s210 + $0x128] sm:$0xff]
        %v364 = vld [vmem:[%s210 + $0x140] sm:$0xff]
        %v365 = vld [vmem:[%s210 + $0x158] sm:$0xff]
        %v366 = vld [vmem:[%s210 + $0x170] sm:$0xff]
        %v367 = vld [vmem:[%s210 + $0x188] sm:$0xff]
        %v368 = vld [vmem:[%s210 + $0x1a0] sm:$0xff]
        %v369 = vld [vmem:[%s210 + $0x1b8] sm:$0xff]
        %v370 = vld [vmem:[%s210 + $0x1d0] sm:$0xff]
        %v371 = vld [vmem:[%s210 + $0x1e8] sm:$0xff]
        %v372 = vld [vmem:[%s210 + $0x200] sm:$0xff]
        %v373 = vld [vmem:[%s210 + $0x218] sm:$0xff]
        %v374 = vld [vmem:[%s210 + $0x230] sm:$0xff]
        %v375 = vld [vmem:[%s210 + $0x248] sm:$0xff]
        %v376 = vld [vmem:[%s210 + $0x260] sm:$0xff]
        %v377 = vld [vmem:[%s210 + $0x278] sm:$0xff]
        %v378 = vld [vmem:[%s210 + $0x290] sm:$0xff]
        %v379 = vld [vmem:[%s210 + $0x2a8] sm:$0xff]
        %v380 = vld [vmem:[%s210 + $0x2c0] sm:$0xff]
        %v381 = vld [vmem:[%s210 + $0x2d8] sm:$0xff]
        %v382 = vld [vmem:[%s210 + $0x2f0] sm:$0xff]
        %v383 = vld [vmem:[#allocation6 + $0x1] sm:$0x1]
        %v385 = vperm.slane %v383, 0
        %v387 = vmul.f32 %v351, %v385
        %v388 = vmul.f32 %v352, %v385
        %v389 = vmul.f32 %v353, %v385
        %v390 = vmul.f32 %v354, %v385
        %v391 = vmul.f32 %v355, %v385
        %v392 = vmul.f32 %v356, %v385
        %v393 = vmul.f32 %v357, %v385
        %v394 = vmul.f32 %v358, %v385
        %v395 = vmul.f32 %v359, %v385
        %v396 = vmul.f32 %v360, %v385
        %v397 = vmul.f32 %v361, %v385
        %v398 = vmul.f32 %v362, %v385
        %v399 = vmul.f32 %v363, %v385
        %v400 = vmul.f32 %v364, %v385
        %v401 = vmul.f32 %v365, %v385
        %v402 = vmul.f32 %v366, %v385
        %v403 = vmul.f32 %v367, %v385
        %v404 = vmul.f32 %v368, %v385
        %v405 = vmul.f32 %v369, %v385
        %v406 = vmul.f32 %v370, %v385
        %v407 = vmul.f32 %v371, %v385
        %v408 = vmul.f32 %v372, %v385
        %v409 = vmul.f32 %v373, %v385
        %v410 = vmul.f32 %v374, %v385
        %v411 = vmul.f32 %v375, %v385
        %v412 = vmul.f32 %v376, %v385
        %v413 = vmul.f32 %v377, %v385
        %v414 = vmul.f32 %v378, %v385
        %v415 = vmul.f32 %v379, %v385
        %v416 = vmul.f32 %v380, %v385
        %v417 = vmul.f32 %v381, %v385
        %v418 = vmul.f32 %v382, %v385
        %v419 = vadd.f32 %v319, %v387
        %v420 = vadd.f32 %v320, %v388
        %v421 = vadd.f32 %v321, %v389
        %v422 = vadd.f32 %v322, %v390
        %v423 = vadd.f32 %v323, %v391
        %v424 = vadd.f32 %v324, %v392
        %v425 = vadd.f32 %v325, %v393
        %v426 = vadd.f32 %v326, %v394
        %v427 = vadd.f32 %v327, %v395
        %v428 = vadd.f32 %v328, %v396
        %v429 = vadd.f32 %v329, %v397
        %v430 = vadd.f32 %v330, %v398
        %v431 = vadd.f32 %v331, %v399
        %v432 = vadd.f32 %v332, %v400
        %v433 = vadd.f32 %v333, %v401
        %v434 = vadd.f32 %v334, %v402
        %v435 = vadd.f32 %v335, %v403
        %v436 = vadd.f32 %v336, %v404
        %v437 = vadd.f32 %v337, %v405
        %v438 = vadd.f32 %v338, %v406
        %v439 = vadd.f32 %v339, %v407
        %v440 = vadd.f32 %v340, %v408
        %v441 = vadd.f32 %v341, %v409
        %v442 = vadd.f32 %v342, %v410
        %v443 = vadd.f32 %v343, %v411
        %v444 = vadd.f32 %v344, %v412
        %v445 = vadd.f32 %v345, %v413
        %v446 = vadd.f32 %v346, %v414
        %v447 = vadd.f32 %v347, %v415
        %v448 = vadd.f32 %v348, %v416
        %v449 = vadd.f32 %v349, %v417
        %v450 = vadd.f32 %v350, %v418
        %v451 = vld [vmem:[%s210 + $0x10] sm:$0xff]
        %v452 = vld [vmem:[%s210 + $0x28] sm:$0xff]
        %v453 = vld [vmem:[%s210 + $0x40] sm:$0xff]
        %v454 = vld [vmem:[%s210 + $0x58] sm:$0xff]
        %v455 = vld [vmem:[%s210 + $0x70] sm:$0xff]
        %v456 = vld [vmem:[%s210 + $0x88] sm:$0xff]
        %v457 = vld [vmem:[%s210 + $0xa0] sm:$0xff]
        %v458 = vld [vmem:[%s210 + $0xb8] sm:$0xff]
        %v459 = vld [vmem:[%s210 + $0xd0] sm:$0xff]
        %v460 = vld [vmem:[%s210 + $0xe8] sm:$0xff]
        %v461 = vld [vmem:[%s210 + $0x100] sm:$0xff]
        %v462 = vld [vmem:[%s210 + $0x118] sm:$0xff]
        %v463 = vld [vmem:[%s210 + $0x130] sm:$0xff]
        %v464 = vld [vmem:[%s210 + $0x148] sm:$0xff]
        %v465 = vld [vmem:[%s210 + $0x160] sm:$0xff]
        %v466 = vld [vmem:[%s210 + $0x178] sm:$0xff]
        %v467 = vld [vmem:[%s210 + $0x190] sm:$0xff]
        %v468 = vld [vmem:[%s210 + $0x1a8] sm:$0xff]
        %v469 = vld [vmem:[%s210 + $0x1c0] sm:$0xff]
        %v470 = vld [vmem:[%s210 + $0x1d8] sm:$0xff]
        %v471 = vld [vmem:[%s210 + $0x1f0] sm:$0xff]
        %v472 = vld [vmem:[%s210 + $0x208] sm:$0xff]
        %v473 = vld [vmem:[%s210 + $0x220] sm:$0xff]
        %v474 = vld [vmem:[%s210 + $0x238] sm:$0xff]
        %v475 = vld [vmem:[%s210 + $0x250] sm:$0xff]
        %v476 = vld [vmem:[%s210 + $0x268] sm:$0xff]
        %v477 = vld [vmem:[%s210 + $0x280] sm:$0xff]
        %v478 = vld [vmem:[%s210 + $0x298] sm:$0xff]
        %v479 = vld [vmem:[%s210 + $0x2b0] sm:$0xff]
        %v480 = vld [vmem:[%s210 + $0x2c8] sm:$0xff]
        %v481 = vld [vmem:[%s210 + $0x2e0] sm:$0xff]
        %v482 = vld [vmem:[%s210 + $0x2f8] sm:$0xff]
        %v483 = vld [vmem:[#allocation6 + $0x2] sm:$0x1]
        %v484 = vlaneseq
        %v485 = vand.u32 %v484, 127
        %v486 = vadd.s32 %v485, 256
        %vm487 = vcmp.lt.s32.totalorder %v486, 300
        %v488 = vsel %vm487, 1, 0
        %vm489 = vcmp.eq.s32.totalorder %v488, 1
        %v490 = vsel %vm489, %v451, 0.0
        %v491 = vsel %vm489, %v452, 0.0
        %v492 = vsel %vm489, %v453, 0.0
        %v493 = vsel %vm489, %v454, 0.0
        %v494 = vsel %vm489, %v455, 0.0
        %v495 = vsel %vm489, %v456, 0.0
        %v496 = vsel %vm489, %v457, 0.0
        %v497 = vsel %vm489, %v458, 0.0
        %v498 = vsel %vm489, %v459, 0.0
        %v499 = vsel %vm489, %v460, 0.0
        %v500 = vsel %vm489, %v461, 0.0
        %v501 = vsel %vm489, %v462, 0.0
        %v502 = vsel %vm489, %v463, 0.0
        %v503 = vsel %vm489, %v464, 0.0
        %v504 = vsel %vm489, %v465, 0.0
        %v505 = vsel %vm489, %v466, 0.0
        %v506 = vsel %vm489, %v467, 0.0
        %v507 = vsel %vm489, %v468, 0.0
        %v508 = vsel %vm489, %v469, 0.0
        %v509 = vsel %vm489, %v470, 0.0
        %v510 = vsel %vm489, %v471, 0.0
        %v511 = vsel %vm489, %v472, 0.0
        %v512 = vsel %vm489, %v473, 0.0
        %v513 = vsel %vm489, %v474, 0.0
        %v514 = vsel %vm489, %v475, 0.0
        %v515 = vsel %vm489, %v476, 0.0
        %v516 = vsel %vm489, %v477, 0.0
        %v517 = vsel %vm489, %v478, 0.0
        %v518 = vsel %vm489, %v479, 0.0
        %v519 = vsel %vm489, %v480, 0.0
        %v520 = vsel %vm489, %v481, 0.0
        %v521 = vsel %vm489, %v482, 0.0
        %v523 = vperm.slane %v483, 0
        %v525 = vmul.f32 %v490, %v523
        %v526 = vmul.f32 %v491, %v523
        %v527 = vmul.f32 %v492, %v523
        %v528 = vmul.f32 %v493, %v523
        %v529 = vmul.f32 %v494, %v523
        %v530 = vmul.f32 %v495, %v523
        %v531 = vmul.f32 %v496, %v523
        %v532 = vmul.f32 %v497, %v523
        %v533 = vmul.f32 %v498, %v523
        %v534 = vmul.f32 %v499, %v523
        %v535 = vmul.f32 %v500, %v523
        %v536 = vmul.f32 %v501, %v523
        %v537 = vmul.f32 %v502, %v523
        %v538 = vmul.f32 %v503, %v523
        %v539 = vmul.f32 %v504, %v523
        %v540 = vmul.f32 %v505, %v523
        %v541 = vmul.f32 %v506, %v523
        %v542 = vmul.f32 %v507, %v523
        %v543 = vmul.f32 %v508, %v523
        %v544 = vmul.f32 %v509, %v523
        %v545 = vmul.f32 %v510, %v523
        %v546 = vmul.f32 %v511, %v523
        %v547 = vmul.f32 %v512, %v523
        %v548 = vmul.f32 %v513, %v523
        %v549 = vmul.f32 %v514, %v523
        %v550 = vmul.f32 %v515, %v523
        %v551 = vmul.f32 %v516, %v523
        %v552 = vmul.f32 %v517, %v523
        %v553 = vmul.f32 %v518, %v523
        %v554 = vmul.f32 %v519, %v523
        %v555 = vmul.f32 %v520, %v523
        %v556 = vmul.f32 %v521, %v523
        %v557 = vadd.f32 %v419, %v525
        %v558 = vadd.f32 %v420, %v526
        %v559 = vadd.f32 %v421, %v527
        %v560 = vadd.f32 %v422, %v528
        %v561 = vadd.f32 %v423, %v529
        %v562 = vadd.f32 %v424, %v530
        %v563 = vadd.f32 %v425, %v531
        %v564 = vadd.f32 %v426, %v532
        %v565 = vadd.f32 %v427, %v533
        %v566 = vadd.f32 %v428, %v534
        %v567 = vadd.f32 %v429, %v535
        %v568 = vadd.f32 %v430, %v536
        %v569 = vadd.f32 %v431, %v537
        %v570 = vadd.f32 %v432, %v538
        %v571 = vadd.f32 %v433, %v539
        %v572 = vadd.f32 %v434, %v540
        %v573 = vadd.f32 %v435, %v541
        %v574 = vadd.f32 %v436, %v542
        %v575 = vadd.f32 %v437, %v543
        %v576 = vadd.f32 %v438, %v544
        %v577 = vadd.f32 %v439, %v545
        %v578 = vadd.f32 %v440, %v546
        %v579 = vadd.f32 %v441, %v547
        %v580 = vadd.f32 %v442, %v548
        %v581 = vadd.f32 %v443, %v549
        %v582 = vadd.f32 %v444, %v550
        %v583 = vadd.f32 %v445, %v551
        %v584 = vadd.f32 %v446, %v552
        %v585 = vadd.f32 %v447, %v553
        %v586 = vadd.f32 %v448, %v554
        %v587 = vadd.f32 %v449, %v555
        %v588 = vadd.f32 %v450, %v556
        %589 = vadd.xlane.f32.xlu0 %v557
        %v590 = vpop.xlane.xlu0 %589
        %591 = vadd.xlane.f32.xlu0 %v558
        %v592 = vpop.xlane.xlu0 %591
        %593 = vadd.xlane.f32.xlu0 %v559
        %v594 = vpop.xlane.xlu0 %593
        %595 = vadd.xlane.f32.xlu0 %v560
        %v596 = vpop.xlane.xlu0 %595
        %597 = vadd.xlane.f32.xlu0 %v561
        %v598 = vpop.xlane.xlu0 %597
        %599 = vadd.xlane.f32.xlu0 %v562
        %v600 = vpop.xlane.xlu0 %599
        %601 = vadd.xlane.f32.xlu0 %v563
        %v602 = vpop.xlane.xlu0 %601
        %603 = vadd.xlane.f32.xlu0 %v564
        %v604 = vpop.xlane.xlu0 %603
        %605 = vadd.xlane.f32.xlu0 %v565
        %v606 = vpop.xlane.xlu0 %605
        %607 = vadd.xlane.f32.xlu0 %v566
        %v608 = vpop.xlane.xlu0 %607
        %609 = vadd.xlane.f32.xlu0 %v567
        %v610 = vpop.xlane.xlu0 %609
        %611 = vadd.xlane.f32.xlu0 %v568
        %v612 = vpop.xlane.xlu0 %611
        %613 = vadd.xlane.f32.xlu0 %v569
        %v614 = vpop.xlane.xlu0 %613
        %615 = vadd.xlane.f32.xlu0 %v570
        %v616 = vpop.xlane.xlu0 %615
        %617 = vadd.xlane.f32.xlu0 %v571
        %v618 = vpop.xlane.xlu0 %617
        %619 = vadd.xlane.f32.xlu0 %v572
        %v620 = vpop.xlane.xlu0 %619
        %621 = vadd.xlane.f32.xlu0 %v573
        %v622 = vpop.xlane.xlu0 %621
        %623 = vadd.xlane.f32.xlu0 %v574
        %v624 = vpop.xlane.xlu0 %623
        %625 = vadd.xlane.f32.xlu0 %v575
        %v626 = vpop.xlane.xlu0 %625
        %627 = vadd.xlane.f32.xlu0 %v576
        %v628 = vpop.xlane.xlu0 %627
        %629 = vadd.xlane.f32.xlu0 %v577
        %v630 = vpop.xlane.xlu0 %629
        %631 = vadd.xlane.f32.xlu0 %v578
        %v632 = vpop.xlane.xlu0 %631
        %633 = vadd.xlane.f32.xlu0 %v579
        %v634 = vpop.xlane.xlu0 %633
        %635 = vadd.xlane.f32.xlu0 %v580
        %v636 = vpop.xlane.xlu0 %635
        %637 = vadd.xlane.f32.xlu0 %v581
        %v638 = vpop.xlane.xlu0 %637
        %639 = vadd.xlane.f32.xlu0 %v582
        %v640 = vpop.xlane.xlu0 %639
        %641 = vadd.xlane.f32.xlu0 %v583
        %v642 = vpop.xlane.xlu0 %641
        %643 = vadd.xlane.f32.xlu0 %v584
        %v644 = vpop.xlane.xlu0 %643
        %645 = vadd.xlane.f32.xlu0 %v585
        %v646 = vpop.xlane.xlu0 %645
        %647 = vadd.xlane.f32.xlu0 %v586
        %v648 = vpop.xlane.xlu0 %647
        %649 = vadd.xlane.f32.xlu0 %v587
        %v650 = vpop.xlane.xlu0 %649
        %651 = vadd.xlane.f32.xlu0 %v588
        %v652 = vpop.xlane.xlu0 %651
        %s653 = sld [smem:[#allocation2]]
        %v654 = vstv %s653
        %v655 = vadd.f32 %v590, %v654
        %v656 = vadd.f32 %v592, %v654
        %v657 = vadd.f32 %v594, %v654
        %v658 = vadd.f32 %v596, %v654
        %v659 = vadd.f32 %v598, %v654
        %v660 = vadd.f32 %v600, %v654
        %v661 = vadd.f32 %v602, %v654
        %v662 = vadd.f32 %v604, %v654
        %v663 = vadd.f32 %v606, %v654
        %v664 = vadd.f32 %v608, %v654
        %v665 = vadd.f32 %v610, %v654
        %v666 = vadd.f32 %v612, %v654
        %v667 = vadd.f32 %v614, %v654
        %v668 = vadd.f32 %v616, %v654
        %v669 = vadd.f32 %v618, %v654
        %v670 = vadd.f32 %v620, %v654
        %v671 = vadd.f32 %v622, %v654
        %v672 = vadd.f32 %v624, %v654
        %v673 = vadd.f32 %v626, %v654
        %v674 = vadd.f32 %v628, %v654
        %v675 = vadd.f32 %v630, %v654
        %v676 = vadd.f32 %v632, %v654
        %v677 = vadd.f32 %v634, %v654
        %v678 = vadd.f32 %v636, %v654
        %v679 = vadd.f32 %v638, %v654
        %v680 = vadd.f32 %v640, %v654
        %v681 = vadd.f32 %v642, %v654
        %v682 = vadd.f32 %v644, %v654
        %v683 = vadd.f32 %v646, %v654
        %v684 = vadd.f32 %v648, %v654
        %v685 = vadd.f32 %v650, %v654
        %v686 = vadd.f32 %v652, %v654
        %v719 = vperm.slane %v655, 0
        %v720 = vperm.slane %v655, 1
        %v721 = vperm.slane %v655, 2
        %v722 = vperm.slane %v655, 3
        %v723 = vperm.slane %v655, 4
        %v724 = vperm.slane %v655, 5
        %v725 = vperm.slane %v655, 6
        %v726 = vperm.slane %v655, 7
        %v727 = vperm.slane %v656, 0
        %v728 = vperm.slane %v656, 1
        %v729 = vperm.slane %v656, 2
        %v730 = vperm.slane %v656, 3
        %v731 = vperm.slane %v656, 4
        %v732 = vperm.slane %v656, 5
        %v733 = vperm.slane %v656, 6
        %v734 = vperm.slane %v656, 7
        %v735 = vperm.slane %v657, 0
        %v736 = vperm.slane %v657, 1
        %v737 = vperm.slane %v657, 2
        %v738 = vperm.slane %v657, 3
        %v739 = vperm.slane %v657, 4
        %v740 = vperm.slane %v657, 5
        %v741 = vperm.slane %v657, 6
        %v742 = vperm.slane %v657, 7
        %v743 = vperm.slane %v658, 0
        %v744 = vperm.slane %v658, 1
        %v745 = vperm.slane %v658, 2
        %v746 = vperm.slane %v658, 3
        %v747 = vperm.slane %v658, 4
        %v748 = vperm.slane %v658, 5
        %v749 = vperm.slane %v658, 6
        %v750 = vperm.slane %v658, 7
        %v751 = vperm.slane %v659, 0
        %v752 = vperm.slane %v659, 1
        %v753 = vperm.slane %v659, 2
        %v754 = vperm.slane %v659, 3
        %v755 = vperm.slane %v659, 4
        %v756 = vperm.slane %v659, 5
        %v757 = vperm.slane %v659, 6
        %v758 = vperm.slane %v659, 7
        %v759 = vperm.slane %v660, 0
        %v760 = vperm.slane %v660, 1
        %v761 = vperm.slane %v660, 2
        %v762 = vperm.slane %v660, 3
        %v763 = vperm.slane %v660, 4
        %v764 = vperm.slane %v660, 5
        %v765 = vperm.slane %v660, 6
        %v766 = vperm.slane %v660, 7
        %v767 = vperm.slane %v661, 0
        %v768 = vperm.slane %v661, 1
        %v769 = vperm.slane %v661, 2
        %v770 = vperm.slane %v661, 3
        %v771 = vperm.slane %v661, 4
        %v772 = vperm.slane %v661, 5
        %v773 = vperm.slane %v661, 6
        %v774 = vperm.slane %v661, 7
        %v775 = vperm.slane %v662, 0
        %v776 = vperm.slane %v662, 1
        %v777 = vperm.slane %v662, 2
        %v778 = vperm.slane %v662, 3
        %v779 = vperm.slane %v662, 4
        %v780 = vperm.slane %v662, 5
        %v781 = vperm.slane %v662, 6
        %v782 = vperm.slane %v662, 7
        %v783 = vperm.slane %v663, 0
        %v784 = vperm.slane %v663, 1
        %v785 = vperm.slane %v663, 2
        %v786 = vperm.slane %v663, 3
        %v787 = vperm.slane %v663, 4
        %v788 = vperm.slane %v663, 5
        %v789 = vperm.slane %v663, 6
        %v790 = vperm.slane %v663, 7
        %v791 = vperm.slane %v664, 0
        %v792 = vperm.slane %v664, 1
        %v793 = vperm.slane %v664, 2
        %v794 = vperm.slane %v664, 3
        %v795 = vperm.slane %v664, 4
        %v796 = vperm.slane %v664, 5
        %v797 = vperm.slane %v664, 6
        %v798 = vperm.slane %v664, 7
        %v799 = vperm.slane %v665, 0
        %v800 = vperm.slane %v665, 1
        %v801 = vperm.slane %v665, 2
        %v802 = vperm.slane %v665, 3
        %v803 = vperm.slane %v665, 4
        %v804 = vperm.slane %v665, 5
        %v805 = vperm.slane %v665, 6
        %v806 = vperm.slane %v665, 7
        %v807 = vperm.slane %v666, 0
        %v808 = vperm.slane %v666, 1
        %v809 = vperm.slane %v666, 2
        %v810 = vperm.slane %v666, 3
        %v811 = vperm.slane %v666, 4
        %v812 = vperm.slane %v666, 5
        %v813 = vperm.slane %v666, 6
        %v814 = vperm.slane %v666, 7
        %v815 = vperm.slane %v667, 0
        %v816 = vperm.slane %v667, 1
        %v817 = vperm.slane %v667, 2
        %v818 = vperm.slane %v667, 3
        %v819 = vperm.slane %v667, 4
        %v820 = vperm.slane %v667, 5
        %v821 = vperm.slane %v667, 6
        %v822 = vperm.slane %v667, 7
        %v823 = vperm.slane %v668, 0
        %v824 = vperm.slane %v668, 1
        %v825 = vperm.slane %v668, 2
        %v826 = vperm.slane %v668, 3
        %v827 = vperm.slane %v668, 4
        %v828 = vperm.slane %v668, 5
        %v829 = vperm.slane %v668, 6
        %v830 = vperm.slane %v668, 7
        %v831 = vperm.slane %v669, 0
        %v832 = vperm.slane %v669, 1
        %v833 = vperm.slane %v669, 2
        %v834 = vperm.slane %v669, 3
        %v835 = vperm.slane %v669, 4
        %v836 = vperm.slane %v669, 5
        %v837 = vperm.slane %v669, 6
        %v838 = vperm.slane %v669, 7
        %v839 = vperm.slane %v670, 0
        %v840 = vperm.slane %v670, 1
        %v841 = vperm.slane %v670, 2
        %v842 = vperm.slane %v670, 3
        %v843 = vperm.slane %v670, 4
        %v844 = vperm.slane %v670, 5
        %v845 = vperm.slane %v670, 6
        %v846 = vperm.slane %v670, 7
        %v847 = vperm.slane %v671, 0
        %v848 = vperm.slane %v671, 1
        %v849 = vperm.slane %v671, 2
        %v850 = vperm.slane %v671, 3
        %v851 = vperm.slane %v671, 4
        %v852 = vperm.slane %v671, 5
        %v853 = vperm.slane %v671, 6
        %v854 = vperm.slane %v671, 7
        %v855 = vperm.slane %v672, 0
        %v856 = vperm.slane %v672, 1
        %v857 = vperm.slane %v672, 2
        %v858 = vperm.slane %v672, 3
        %v859 = vperm.slane %v672, 4
        %v860 = vperm.slane %v672, 5
        %v861 = vperm.slane %v672, 6
        %v862 = vperm.slane %v672, 7
        %v863 = vperm.slane %v673, 0
        %v864 = vperm.slane %v673, 1
        %v865 = vperm.slane %v673, 2
        %v866 = vperm.slane %v673, 3
        %v867 = vperm.slane %v673, 4
        %v868 = vperm.slane %v673, 5
        %v869 = vperm.slane %v673, 6
        %v870 = vperm.slane %v673, 7
        %v871 = vperm.slane %v674, 0
        %v872 = vperm.slane %v674, 1
        %v873 = vperm.slane %v674, 2
        %v874 = vperm.slane %v674, 3
        %v875 = vperm.slane %v674, 4
        %v876 = vperm.slane %v674, 5
        %v877 = vperm.slane %v674, 6
        %v878 = vperm.slane %v674, 7
        %v879 = vperm.slane %v675, 0
        %v880 = vperm.slane %v675, 1
        %v881 = vperm.slane %v675, 2
        %v882 = vperm.slane %v675, 3
        %v883 = vperm.slane %v675, 4
        %v884 = vperm.slane %v675, 5
        %v885 = vperm.slane %v675, 6
        %v886 = vperm.slane %v675, 7
        %v887 = vperm.slane %v676, 0
        %v888 = vperm.slane %v676, 1
        %v889 = vperm.slane %v676, 2
        %v890 = vperm.slane %v676, 3
        %v891 = vperm.slane %v676, 4
        %v892 = vperm.slane %v676, 5
        %v893 = vperm.slane %v676, 6
        %v894 = vperm.slane %v676, 7
        %v895 = vperm.slane %v677, 0
        %v896 = vperm.slane %v677, 1
        %v897 = vperm.slane %v677, 2
        %v898 = vperm.slane %v677, 3
        %v899 = vperm.slane %v677, 4
        %v900 = vperm.slane %v677, 5
        %v901 = vperm.slane %v677, 6
        %v902 = vperm.slane %v677, 7
        %v903 = vperm.slane %v678, 0
        %v904 = vperm.slane %v678, 1
        %v905 = vperm.slane %v678, 2
        %v906 = vperm.slane %v678, 3
        %v907 = vperm.slane %v678, 4
        %v908 = vperm.slane %v678, 5
        %v909 = vperm.slane %v678, 6
        %v910 = vperm.slane %v678, 7
        %v911 = vperm.slane %v679, 0
        %v912 = vperm.slane %v679, 1
        %v913 = vperm.slane %v679, 2
        %v914 = vperm.slane %v679, 3
        %v915 = vperm.slane %v679, 4
        %v916 = vperm.slane %v679, 5
        %v917 = vperm.slane %v679, 6
        %v918 = vperm.slane %v679, 7
        %v919 = vperm.slane %v680, 0
        %v920 = vperm.slane %v680, 1
        %v921 = vperm.slane %v680, 2
        %v922 = vperm.slane %v680, 3
        %v923 = vperm.slane %v680, 4
        %v924 = vperm.slane %v680, 5
        %v925 = vperm.slane %v680, 6
        %v926 = vperm.slane %v680, 7
        %v927 = vperm.slane %v681, 0
        %v928 = vperm.slane %v681, 1
        %v929 = vperm.slane %v681, 2
        %v930 = vperm.slane %v681, 3
        %v931 = vperm.slane %v681, 4
        %v932 = vperm.slane %v681, 5
        %v933 = vperm.slane %v681, 6
        %v934 = vperm.slane %v681, 7
        %v935 = vperm.slane %v682, 0
        %v936 = vperm.slane %v682, 1
        %v937 = vperm.slane %v682, 2
        %v938 = vperm.slane %v682, 3
        %v939 = vperm.slane %v682, 4
        %v940 = vperm.slane %v682, 5
        %v941 = vperm.slane %v682, 6
        %v942 = vperm.slane %v682, 7
        %v943 = vperm.slane %v683, 0
        %v944 = vperm.slane %v683, 1
        %v945 = vperm.slane %v683, 2
        %v946 = vperm.slane %v683, 3
        %v947 = vperm.slane %v683, 4
        %v948 = vperm.slane %v683, 5
        %v949 = vperm.slane %v683, 6
        %v950 = vperm.slane %v683, 7
        %v951 = vperm.slane %v684, 0
        %v952 = vperm.slane %v684, 1
        %v953 = vperm.slane %v684, 2
        %v954 = vperm.slane %v684, 3
        %v955 = vperm.slane %v684, 4
        %v956 = vperm.slane %v684, 5
        %v957 = vperm.slane %v684, 6
        %v958 = vperm.slane %v684, 7
        %v959 = vperm.slane %v685, 0
        %v960 = vperm.slane %v685, 1
        %v961 = vperm.slane %v685, 2
        %v962 = vperm.slane %v685, 3
        %v963 = vperm.slane %v685, 4
        %v964 = vperm.slane %v685, 5
        %v965 = vperm.slane %v685, 6
        %v966 = vperm.slane %v685, 7
        %v967 = vperm.slane %v686, 0
        %v968 = vperm.slane %v686, 1
        %v969 = vperm.slane %v686, 2
        %v970 = vperm.slane %v686, 3
        %v971 = vperm.slane %v686, 4
        %v972 = vperm.slane %v686, 5
        %v973 = vperm.slane %v686, 6
        %v974 = vperm.slane %v686, 7
        %975 = vst [vmem:[#allocation1] ss:$9 sm:$0xff] %v719
        %s976 = scalar_lea.vmem [#allocation1], 1
        %977 = vst [vmem:[%s976] ss:$9 sm:$0xff] %v720
        %s978 = scalar_lea.vmem [#allocation1], 2
        %979 = vst [vmem:[%s978] ss:$9 sm:$0xff] %v721
        %s980 = scalar_lea.vmem [#allocation1], 3
        %981 = vst [vmem:[%s980] ss:$9 sm:$0xff] %v722
        %s982 = scalar_lea.vmem [#allocation1], 4
        %983 = vst [vmem:[%s982] ss:$9 sm:$0xff] %v723
        %s984 = scalar_lea.vmem [#allocation1], 5
        %985 = vst [vmem:[%s984] ss:$9 sm:$0xff] %v724
        %s986 = scalar_lea.vmem [#allocation1], 6
        %987 = vst [vmem:[%s986] ss:$9 sm:$0xff] %v725
        %s988 = scalar_lea.vmem [#allocation1], 7
        %989 = vst [vmem:[%s988] ss:$9 sm:$0xff] %v726
        %v990 = vld [vmem:[#allocation1] sm:$0xff]
        %991 = vst [vmem:[#allocation1] ss:$9 sm:$0xff] %v727
        %992 = vst [vmem:[%s976] ss:$9 sm:$0xff] %v728
        %993 = vst [vmem:[%s978] ss:$9 sm:$0xff] %v729
        %994 = vst [vmem:[%s980] ss:$9 sm:$0xff] %v730
        %995 = vst [vmem:[%s982] ss:$9 sm:$0xff] %v731
        %996 = vst [vmem:[%s984] ss:$9 sm:$0xff] %v732
        %997 = vst [vmem:[%s986] ss:$9 sm:$0xff] %v733
        %998 = vst [vmem:[%s988] ss:$9 sm:$0xff] %v734
        %v999 = vld [vmem:[#allocation1] sm:$0xff]
        %1000 = vst [vmem:[#allocation1] ss:$9 sm:$0xff] %v735
        %1001 = vst [vmem:[%s976] ss:$9 sm:$0xff] %v736
        %1002 = vst [vmem:[%s978] ss:$9 sm:$0xff] %v737
        %1003 = vst [vmem:[%s980] ss:$9 sm:$0xff] %v738
        %1004 = vst [vmem:[%s982] ss:$9 sm:$0xff] %v739
        %1005 = vst [vmem:[%s984] ss:$9 sm:$0xff] %v740
        %1006 = vst [vmem:[%s986] ss:$9 sm:$0xff] %v741
        %1007 = vst [vmem:[%s988] ss:$9 sm:$0xff] %v742
        %v1008 = vld [vmem:[#allocation1] sm:$0xff]
        %1009 = vst [vmem:[#allocation1] ss:$9 sm:$0xff] %v743
        %1010 = vst [vmem:[%s976] ss:$9 sm:$0xff] %v744
        %1011 = vst [vmem:[%s978] ss:$9 sm:$0xff] %v745
        %1012 = vst [vmem:[%s980] ss:$9 sm:$0xff] %v746
        %1013 = vst [vmem:[%s982] ss:$9 sm:$0xff] %v747
        %1014 = vst [vmem:[%s984] ss:$9 sm:$0xff] %v748
        %1015 = vst [vmem:[%s986] ss:$9 sm:$0xff] %v749
        %1016 = vst [vmem:[%s988] ss:$9 sm:$0xff] %v750
        %v1017 = vld [vmem:[#allocation1] sm:$0xff]
        %1018 = vst [vmem:[#allocation1] ss:$9 sm:$0xff] %v751
        %1019 = vst [vmem:[%s976] ss:$9 sm:$0xff] %v752
        %1020 = vst [vmem:[%s978] ss:$9 sm:$0xff] %v753
        %1021 = vst [vmem:[%s980] ss:$9 sm:$0xff] %v754
        %1022 = vst [vmem:[%s982] ss:$9 sm:$0xff] %v755
        %1023 = vst [vmem:[%s984] ss:$9 sm:$0xff] %v756
        %1024 = vst [vmem:[%s986] ss:$9 sm:$0xff] %v757
        %1025 = vst [vmem:[%s988] ss:$9 sm:$0xff] %v758
        %v1026 = vld [vmem:[#allocation1] sm:$0xff]
        %1027 = vst [vmem:[#allocation1] ss:$9 sm:$0xff] %v759
        %1028 = vst [vmem:[%s976] ss:$9 sm:$0xff] %v760
        %1029 = vst [vmem:[%s978] ss:$9 sm:$0xff] %v761
        %1030 = vst [vmem:[%s980] ss:$9 sm:$0xff] %v762
        %1031 = vst [vmem:[%s982] ss:$9 sm:$0xff] %v763
        %1032 = vst [vmem:[%s984] ss:$9 sm:$0xff] %v764
        %1033 = vst [vmem:[%s986] ss:$9 sm:$0xff] %v765
        %1034 = vst [vmem:[%s988] ss:$9 sm:$0xff] %v766
        %v1035 = vld [vmem:[#allocation1] sm:$0xff]
        %1036 = vst [vmem:[#allocation1] ss:$9 sm:$0xff] %v767
        %1037 = vst [vmem:[%s976] ss:$9 sm:$0xff] %v768
        %1038 = vst [vmem:[%s978] ss:$9 sm:$0xff] %v769
        %1039 = vst [vmem:[%s980] ss:$9 sm:$0xff] %v770
        %1040 = vst [vmem:[%s982] ss:$9 sm:$0xff] %v771
        %1041 = vst [vmem:[%s984] ss:$9 sm:$0xff] %v772
        %1042 = vst [vmem:[%s986] ss:$9 sm:$0xff] %v773
        %1043 = vst [vmem:[%s988] ss:$9 sm:$0xff] %v774
        %v1044 = vld [vmem:[#allocation1] sm:$0xff]
        %1045 = vst [vmem:[#allocation1] ss:$9 sm:$0xff] %v775
        %1046 = vst [vmem:[%s976] ss:$9 sm:$0xff] %v776
        %1047 = vst [vmem:[%s978] ss:$9 sm:$0xff] %v777
        %1048 = vst [vmem:[%s980] ss:$9 sm:$0xff] %v778
        %1049 = vst [vmem:[%s982] ss:$9 sm:$0xff] %v779
        %1050 = vst [vmem:[%s984] ss:$9 sm:$0xff] %v780
        %1051 = vst [vmem:[%s986] ss:$9 sm:$0xff] %v781
        %1052 = vst [vmem:[%s988] ss:$9 sm:$0xff] %v782
        %v1053 = vld [vmem:[#allocation1] sm:$0xff]
        %1054 = vst [vmem:[#allocation1] ss:$9 sm:$0xff] %v783
        %1055 = vst [vmem:[%s976] ss:$9 sm:$0xff] %v784
        %1056 = vst [vmem:[%s978] ss:$9 sm:$0xff] %v785
        %1057 = vst [vmem:[%s980] ss:$9 sm:$0xff] %v786
        %1058 = vst [vmem:[%s982] ss:$9 sm:$0xff] %v787
        %1059 = vst [vmem:[%s984] ss:$9 sm:$0xff] %v788
        %1060 = vst [vmem:[%s986] ss:$9 sm:$0xff] %v789
        %1061 = vst [vmem:[%s988] ss:$9 sm:$0xff] %v790
        %v1062 = vld [vmem:[#allocation1] sm:$0xff]
        %1063 = vst [vmem:[#allocation1] ss:$9 sm:$0xff] %v791
        %1064 = vst [vmem:[%s976] ss:$9 sm:$0xff] %v792
        %1065 = vst [vmem:[%s978] ss:$9 sm:$0xff] %v793
        %1066 = vst [vmem:[%s980] ss:$9 sm:$0xff] %v794
        %1067 = vst [vmem:[%s982] ss:$9 sm:$0xff] %v795
        %1068 = vst [vmem:[%s984] ss:$9 sm:$0xff] %v796
        %1069 = vst [vmem:[%s986] ss:$9 sm:$0xff] %v797
        %1070 = vst [vmem:[%s988] ss:$9 sm:$0xff] %v798
        %v1071 = vld [vmem:[#allocation1] sm:$0xff]
        %1072 = vst [vmem:[#allocation1] ss:$9 sm:$0xff] %v799
        %1073 = vst [vmem:[%s976] ss:$9 sm:$0xff] %v800
        %1074 = vst [vmem:[%s978] ss:$9 sm:$0xff] %v801
        %1075 = vst [vmem:[%s980] ss:$9 sm:$0xff] %v802
        %1076 = vst [vmem:[%s982] ss:$9 sm:$0xff] %v803
        %1077 = vst [vmem:[%s984] ss:$9 sm:$0xff] %v804
        %1078 = vst [vmem:[%s986] ss:$9 sm:$0xff] %v805
        %1079 = vst [vmem:[%s988] ss:$9 sm:$0xff] %v806
        %v1080 = vld [vmem:[#allocation1] sm:$0xff]
        %1081 = vst [vmem:[#allocation1] ss:$9 sm:$0xff] %v807
        %1082 = vst [vmem:[%s976] ss:$9 sm:$0xff] %v808
        %1083 = vst [vmem:[%s978] ss:$9 sm:$0xff] %v809
        %1084 = vst [vmem:[%s980] ss:$9 sm:$0xff] %v810
        %1085 = vst [vmem:[%s982] ss:$9 sm:$0xff] %v811
        %1086 = vst [vmem:[%s984] ss:$9 sm:$0xff] %v812
        %1087 = vst [vmem:[%s986] ss:$9 sm:$0xff] %v813
        %1088 = vst [vmem:[%s988] ss:$9 sm:$0xff] %v814
        %v1089 = vld [vmem:[#allocation1] sm:$0xff]
        %1090 = vst [vmem:[#allocation1] ss:$9 sm:$0xff] %v815
        %1091 = vst [vmem:[%s976] ss:$9 sm:$0xff] %v816
        %1092 = vst [vmem:[%s978] ss:$9 sm:$0xff] %v817
        %1093 = vst [vmem:[%s980] ss:$9 sm:$0xff] %v818
        %1094 = vst [vmem:[%s982] ss:$9 sm:$0xff] %v819
        %1095 = vst [vmem:[%s984] ss:$9 sm:$0xff] %v820
        %1096 = vst [vmem:[%s986] ss:$9 sm:$0xff] %v821
        %1097 = vst [vmem:[%s988] ss:$9 sm:$0xff] %v822
        %v1098 = vld [vmem:[#allocation1] sm:$0xff]
        %1099 = vst [vmem:[#allocation1] ss:$9 sm:$0xff] %v823
        %1100 = vst [vmem:[%s976] ss:$9 sm:$0xff] %v824
        %1101 = vst [vmem:[%s978] ss:$9 sm:$0xff] %v825
        %1102 = vst [vmem:[%s980] ss:$9 sm:$0xff] %v826
        %1103 = vst [vmem:[%s982] ss:$9 sm:$0xff] %v827
        %1104 = vst [vmem:[%s984] ss:$9 sm:$0xff] %v828
        %1105 = vst [vmem:[%s986] ss:$9 sm:$0xff] %v829
        %1106 = vst [vmem:[%s988] ss:$9 sm:$0xff] %v830
        %v1107 = vld [vmem:[#allocation1] sm:$0xff]
        %1108 = vst [vmem:[#allocation1] ss:$9 sm:$0xff] %v831
        %1109 = vst [vmem:[%s976] ss:$9 sm:$0xff] %v832
        %1110 = vst [vmem:[%s978] ss:$9 sm:$0xff] %v833
        %1111 = vst [vmem:[%s980] ss:$9 sm:$0xff] %v834
        %1112 = vst [vmem:[%s982] ss:$9 sm:$0xff] %v835
        %1113 = vst [vmem:[%s984] ss:$9 sm:$0xff] %v836
        %1114 = vst [vmem:[%s986] ss:$9 sm:$0xff] %v837
        %1115 = vst [vmem:[%s988] ss:$9 sm:$0xff] %v838
        %v1116 = vld [vmem:[#allocation1] sm:$0xff]
        %1117 = vst [vmem:[#allocation1] ss:$9 sm:$0xff] %v839
        %1118 = vst [vmem:[%s976] ss:$9 sm:$0xff] %v840
        %1119 = vst [vmem:[%s978] ss:$9 sm:$0xff] %v841
        %1120 = vst [vmem:[%s980] ss:$9 sm:$0xff] %v842
        %1121 = vst [vmem:[%s982] ss:$9 sm:$0xff] %v843
        %1122 = vst [vmem:[%s984] ss:$9 sm:$0xff] %v844
        %1123 = vst [vmem:[%s986] ss:$9 sm:$0xff] %v845
        %1124 = vst [vmem:[%s988] ss:$9 sm:$0xff] %v846
        %v1125 = vld [vmem:[#allocation1] sm:$0xff]
        %1126 = vst [vmem:[#allocation1] ss:$9 sm:$0xff] %v847
        %1127 = vst [vmem:[%s976] ss:$9 sm:$0xff] %v848
        %1128 = vst [vmem:[%s978] ss:$9 sm:$0xff] %v849
        %1129 = vst [vmem:[%s980] ss:$9 sm:$0xff] %v850
        %1130 = vst [vmem:[%s982] ss:$9 sm:$0xff] %v851
        %1131 = vst [vmem:[%s984] ss:$9 sm:$0xff] %v852
        %1132 = vst [vmem:[%s986] ss:$9 sm:$0xff] %v853
        %1133 = vst [vmem:[%s988] ss:$9 sm:$0xff] %v854
        %v1134 = vld [vmem:[#allocation1] sm:$0xff]
        %1135 = vst [vmem:[#allocation1] ss:$9 sm:$0xff] %v855
        %1136 = vst [vmem:[%s976] ss:$9 sm:$0xff] %v856
        %1137 = vst [vmem:[%s978] ss:$9 sm:$0xff] %v857
        %1138 = vst [vmem:[%s980] ss:$9 sm:$0xff] %v858
        %1139 = vst [vmem:[%s982] ss:$9 sm:$0xff] %v859
        %1140 = vst [vmem:[%s984] ss:$9 sm:$0xff] %v860
        %1141 = vst [vmem:[%s986] ss:$9 sm:$0xff] %v861
        %1142 = vst [vmem:[%s988] ss:$9 sm:$0xff] %v862
        %v1143 = vld [vmem:[#allocation1] sm:$0xff]
        %1144 = vst [vmem:[#allocation1] ss:$9 sm:$0xff] %v863
        %1145 = vst [vmem:[%s976] ss:$9 sm:$0xff] %v864
        %1146 = vst [vmem:[%s978] ss:$9 sm:$0xff] %v865
        %1147 = vst [vmem:[%s980] ss:$9 sm:$0xff] %v866
        %1148 = vst [vmem:[%s982] ss:$9 sm:$0xff] %v867
        %1149 = vst [vmem:[%s984] ss:$9 sm:$0xff] %v868
        %1150 = vst [vmem:[%s986] ss:$9 sm:$0xff] %v869
        %1151 = vst [vmem:[%s988] ss:$9 sm:$0xff] %v870
        %v1152 = vld [vmem:[#allocation1] sm:$0xff]
        %1153 = vst [vmem:[#allocation1] ss:$9 sm:$0xff] %v871
        %1154 = vst [vmem:[%s976] ss:$9 sm:$0xff] %v872
        %1155 = vst [vmem:[%s978] ss:$9 sm:$0xff] %v873
        %1156 = vst [vmem:[%s980] ss:$9 sm:$0xff] %v874
        %1157 = vst [vmem:[%s982] ss:$9 sm:$0xff] %v875
        %1158 = vst [vmem:[%s984] ss:$9 sm:$0xff] %v876
        %1159 = vst [vmem:[%s986] ss:$9 sm:$0xff] %v877
        %1160 = vst [vmem:[%s988] ss:$9 sm:$0xff] %v878
        %v1161 = vld [vmem:[#allocation1] sm:$0xff]
        %1162 = vst [vmem:[#allocation1] ss:$9 sm:$0xff] %v879
        %1163 = vst [vmem:[%s976] ss:$9 sm:$0xff] %v880
        %1164 = vst [vmem:[%s978] ss:$9 sm:$0xff] %v881
        %1165 = vst [vmem:[%s980] ss:$9 sm:$0xff] %v882
        %1166 = vst [vmem:[%s982] ss:$9 sm:$0xff] %v883
        %1167 = vst [vmem:[%s984] ss:$9 sm:$0xff] %v884
        %1168 = vst [vmem:[%s986] ss:$9 sm:$0xff] %v885
        %1169 = vst [vmem:[%s988] ss:$9 sm:$0xff] %v886
        %v1170 = vld [vmem:[#allocation1] sm:$0xff]
        %1171 = vst [vmem:[#allocation1] ss:$9 sm:$0xff] %v887
        %1172 = vst [vmem:[%s976] ss:$9 sm:$0xff] %v888
        %1173 = vst [vmem:[%s978] ss:$9 sm:$0xff] %v889
        %1174 = vst [vmem:[%s980] ss:$9 sm:$0xff] %v890
        %1175 = vst [vmem:[%s982] ss:$9 sm:$0xff] %v891
        %1176 = vst [vmem:[%s984] ss:$9 sm:$0xff] %v892
        %1177 = vst [vmem:[%s986] ss:$9 sm:$0xff] %v893
        %1178 = vst [vmem:[%s988] ss:$9 sm:$0xff] %v894
        %v1179 = vld [vmem:[#allocation1] sm:$0xff]
        %1180 = vst [vmem:[#allocation1] ss:$9 sm:$0xff] %v895
        %1181 = vst [vmem:[%s976] ss:$9 sm:$0xff] %v896
        %1182 = vst [vmem:[%s978] ss:$9 sm:$0xff] %v897
        %1183 = vst [vmem:[%s980] ss:$9 sm:$0xff] %v898
        %1184 = vst [vmem:[%s982] ss:$9 sm:$0xff] %v899
        %1185 = vst [vmem:[%s984] ss:$9 sm:$0xff] %v900
        %1186 = vst [vmem:[%s986] ss:$9 sm:$0xff] %v901
        %1187 = vst [vmem:[%s988] ss:$9 sm:$0xff] %v902
        %v1188 = vld [vmem:[#allocation1] sm:$0xff]
        %1189 = vst [vmem:[#allocation1] ss:$9 sm:$0xff] %v903
        %1190 = vst [vmem:[%s976] ss:$9 sm:$0xff] %v904
        %1191 = vst [vmem:[%s978] ss:$9 sm:$0xff] %v905
        %1192 = vst [vmem:[%s980] ss:$9 sm:$0xff] %v906
        %1193 = vst [vmem:[%s982] ss:$9 sm:$0xff] %v907
        %1194 = vst [vmem:[%s984] ss:$9 sm:$0xff] %v908
        %1195 = vst [vmem:[%s986] ss:$9 sm:$0xff] %v909
        %1196 = vst [vmem:[%s988] ss:$9 sm:$0xff] %v910
        %v1197 = vld [vmem:[#allocation1] sm:$0xff]
        %1198 = vst [vmem:[#allocation1] ss:$9 sm:$0xff] %v911
        %1199 = vst [vmem:[%s976] ss:$9 sm:$0xff] %v912
        %1200 = vst [vmem:[%s978] ss:$9 sm:$0xff] %v913
        %1201 = vst [vmem:[%s980] ss:$9 sm:$0xff] %v914
        %1202 = vst [vmem:[%s982] ss:$9 sm:$0xff] %v915
        %1203 = vst [vmem:[%s984] ss:$9 sm:$0xff] %v916
        %1204 = vst [vmem:[%s986] ss:$9 sm:$0xff] %v917
        %1205 = vst [vmem:[%s988] ss:$9 sm:$0xff] %v918
        %v1206 = vld [vmem:[#allocation1] sm:$0xff]
        %1207 = vst [vmem:[#allocation1] ss:$9 sm:$0xff] %v919
        %1208 = vst [vmem:[%s976] ss:$9 sm:$0xff] %v920
        %1209 = vst [vmem:[%s978] ss:$9 sm:$0xff] %v921
        %1210 = vst [vmem:[%s980] ss:$9 sm:$0xff] %v922
        %1211 = vst [vmem:[%s982] ss:$9 sm:$0xff] %v923
        %1212 = vst [vmem:[%s984] ss:$9 sm:$0xff] %v924
        %1213 = vst [vmem:[%s986] ss:$9 sm:$0xff] %v925
        %1214 = vst [vmem:[%s988] ss:$9 sm:$0xff] %v926
        %v1215 = vld [vmem:[#allocation1] sm:$0xff]
        %1216 = vst [vmem:[#allocation1] ss:$9 sm:$0xff] %v927
        %1217 = vst [vmem:[%s976] ss:$9 sm:$0xff] %v928
        %1218 = vst [vmem:[%s978] ss:$9 sm:$0xff] %v929
        %1219 = vst [vmem:[%s980] ss:$9 sm:$0xff] %v930
        %1220 = vst [vmem:[%s982] ss:$9 sm:$0xff] %v931
        %1221 = vst [vmem:[%s984] ss:$9 sm:$0xff] %v932
        %1222 = vst [vmem:[%s986] ss:$9 sm:$0xff] %v933
        %1223 = vst [vmem:[%s988] ss:$9 sm:$0xff] %v934
        %v1224 = vld [vmem:[#allocation1] sm:$0xff]
        %1225 = vst [vmem:[#allocation1] ss:$9 sm:$0xff] %v935
        %1226 = vst [vmem:[%s976] ss:$9 sm:$0xff] %v936
        %1227 = vst [vmem:[%s978] ss:$9 sm:$0xff] %v937
        %1228 = vst [vmem:[%s980] ss:$9 sm:$0xff] %v938
        %1229 = vst [vmem:[%s982] ss:$9 sm:$0xff] %v939
        %1230 = vst [vmem:[%s984] ss:$9 sm:$0xff] %v940
        %1231 = vst [vmem:[%s986] ss:$9 sm:$0xff] %v941
        %1232 = vst [vmem:[%s988] ss:$9 sm:$0xff] %v942
        %v1233 = vld [vmem:[#allocation1] sm:$0xff]
        %1234 = vst [vmem:[#allocation1] ss:$9 sm:$0xff] %v943
        %1235 = vst [vmem:[%s976] ss:$9 sm:$0xff] %v944
        %1236 = vst [vmem:[%s978] ss:$9 sm:$0xff] %v945
        %1237 = vst [vmem:[%s980] ss:$9 sm:$0xff] %v946
        %1238 = vst [vmem:[%s982] ss:$9 sm:$0xff] %v947
        %1239 = vst [vmem:[%s984] ss:$9 sm:$0xff] %v948
        %1240 = vst [vmem:[%s986] ss:$9 sm:$0xff] %v949
        %1241 = vst [vmem:[%s988] ss:$9 sm:$0xff] %v950
        %v1242 = vld [vmem:[#allocation1] sm:$0xff]
        %1243 = vst [vmem:[#allocation1] ss:$9 sm:$0xff] %v951
        %1244 = vst [vmem:[%s976] ss:$9 sm:$0xff] %v952
        %1245 = vst [vmem:[%s978] ss:$9 sm:$0xff] %v953
        %1246 = vst [vmem:[%s980] ss:$9 sm:$0xff] %v954
        %1247 = vst [vmem:[%s982] ss:$9 sm:$0xff] %v955
        %1248 = vst [vmem:[%s984] ss:$9 sm:$0xff] %v956
        %1249 = vst [vmem:[%s986] ss:$9 sm:$0xff] %v957
        %1250 = vst [vmem:[%s988] ss:$9 sm:$0xff] %v958
        %v1251 = vld [vmem:[#allocation1] sm:$0xff]
        %1252 = vst [vmem:[#allocation1] ss:$9 sm:$0xff] %v959
        %1253 = vst [vmem:[%s976] ss:$9 sm:$0xff] %v960
        %1254 = vst [vmem:[%s978] ss:$9 sm:$0xff] %v961
        %1255 = vst [vmem:[%s980] ss:$9 sm:$0xff] %v962
        %1256 = vst [vmem:[%s982] ss:$9 sm:$0xff] %v963
        %1257 = vst [vmem:[%s984] ss:$9 sm:$0xff] %v964
        %1258 = vst [vmem:[%s986] ss:$9 sm:$0xff] %v965
        %1259 = vst [vmem:[%s988] ss:$9 sm:$0xff] %v966
        %v1260 = vld [vmem:[#allocation1] sm:$0xff]
        %1261 = vst [vmem:[#allocation1] ss:$9 sm:$0xff] %v967
        %1262 = vst [vmem:[%s976] ss:$9 sm:$0xff] %v968
        %1263 = vst [vmem:[%s978] ss:$9 sm:$0xff] %v969
        %1264 = vst [vmem:[%s980] ss:$9 sm:$0xff] %v970
        %1265 = vst [vmem:[%s982] ss:$9 sm:$0xff] %v971
        %1266 = vst [vmem:[%s984] ss:$9 sm:$0xff] %v972
        %1267 = vst [vmem:[%s986] ss:$9 sm:$0xff] %v973
        %1268 = vst [vmem:[%s988] ss:$9 sm:$0xff] %v974
        %v1269 = vld [vmem:[#allocation1] sm:$0xff]
        %1270 = vset.pattern.permute.xlu0 0
        %1271 = vperm.xlu0 %1270, %v990
        %v1272 = vpop.permute.xlu0 %1271
        %1273 = vset.pattern.permute.xlu0 0
        %1274 = vperm.xlu0 %1273, %v999
        %v1275 = vpop.permute.xlu0 %1274
        %1276 = vset.pattern.permute.xlu0 0
        %1277 = vperm.xlu0 %1276, %v1008
        %v1278 = vpop.permute.xlu0 %1277
        %1279 = vset.pattern.permute.xlu0 0
        %1280 = vperm.xlu0 %1279, %v1017
        %v1281 = vpop.permute.xlu0 %1280
        %1282 = vset.pattern.permute.xlu0 0
        %1283 = vperm.xlu0 %1282, %v1026
        %v1284 = vpop.permute.xlu0 %1283
        %1285 = vset.pattern.permute.xlu0 0
        %1286 = vperm.xlu0 %1285, %v1035
        %v1287 = vpop.permute.xlu0 %1286
        %1288 = vset.pattern.permute.xlu0 0
        %1289 = vperm.xlu0 %1288, %v1044
        %v1290 = vpop.permute.xlu0 %1289
        %1291 = vset.pattern.permute.xlu0 0
        %1292 = vperm.xlu0 %1291, %v1053
        %v1293 = vpop.permute.xlu0 %1292
        %1294 = vset.pattern.permute.xlu0 0
        %1295 = vperm.xlu0 %1294, %v1062
        %v1296 = vpop.permute.xlu0 %1295
        %1297 = vset.pattern.permute.xlu0 0
        %1298 = vperm.xlu0 %1297, %v1071
        %v1299 = vpop.permute.xlu0 %1298
        %1300 = vset.pattern.permute.xlu0 0
        %1301 = vperm.xlu0 %1300, %v1080
        %v1302 = vpop.permute.xlu0 %1301
        %1303 = vset.pattern.permute.xlu0 0
        %1304 = vperm.xlu0 %1303, %v1089
        %v1305 = vpop.permute.xlu0 %1304
        %1306 = vset.pattern.permute.xlu0 0
        %1307 = vperm.xlu0 %1306, %v1098
        %v1308 = vpop.permute.xlu0 %1307
        %1309 = vset.pattern.permute.xlu0 0
        %1310 = vperm.xlu0 %1309, %v1107
        %v1311 = vpop.permute.xlu0 %1310
        %1312 = vset.pattern.permute.xlu0 0
        %1313 = vperm.xlu0 %1312, %v1116
        %v1314 = vpop.permute.xlu0 %1313
        %1315 = vset.pattern.permute.xlu0 0
        %1316 = vperm.xlu0 %1315, %v1125
        %v1317 = vpop.permute.xlu0 %1316
        %1318 = vset.pattern.permute.xlu0 0
        %1319 = vperm.xlu0 %1318, %v1134
        %v1320 = vpop.permute.xlu0 %1319
        %1321 = vset.pattern.permute.xlu0 0
        %1322 = vperm.xlu0 %1321, %v1143
        %v1323 = vpop.permute.xlu0 %1322
        %1324 = vset.pattern.permute.xlu0 0
        %1325 = vperm.xlu0 %1324, %v1152
        %v1326 = vpop.permute.xlu0 %1325
        %1327 = vset.pattern.permute.xlu0 0
        %1328 = vperm.xlu0 %1327, %v1161
        %v1329 = vpop.permute.xlu0 %1328
        %1330 = vset.pattern.permute.xlu0 0
        %1331 = vperm.xlu0 %1330, %v1170
        %v1332 = vpop.permute.xlu0 %1331
        %1333 = vset.pattern.permute.xlu0 0
        %1334 = vperm.xlu0 %1333, %v1179
        %v1335 = vpop.permute.xlu0 %1334
        %1336 = vset.pattern.permute.xlu0 0
        %1337 = vperm.xlu0 %1336, %v1188
        %v1338 = vpop.permute.xlu0 %1337
        %1339 = vset.pattern.permute.xlu0 0
        %1340 = vperm.xlu0 %1339, %v1197
        %v1341 = vpop.permute.xlu0 %1340
        %1342 = vset.pattern.permute.xlu0 0
        %1343 = vperm.xlu0 %1342, %v1206
        %v1344 = vpop.permute.xlu0 %1343
        %1345 = vset.pattern.permute.xlu0 0
        %1346 = vperm.xlu0 %1345, %v1215
        %v1347 = vpop.permute.xlu0 %1346
        %1348 = vset.pattern.permute.xlu0 0
        %1349 = vperm.xlu0 %1348, %v1224
        %v1350 = vpop.permute.xlu0 %1349
        %1351 = vset.pattern.permute.xlu0 0
        %1352 = vperm.xlu0 %1351, %v1233
        %v1353 = vpop.permute.xlu0 %1352
        %1354 = vset.pattern.permute.xlu0 0
        %1355 = vperm.xlu0 %1354, %v1242
        %v1356 = vpop.permute.xlu0 %1355
        %1357 = vset.pattern.permute.xlu0 0
        %1358 = vperm.xlu0 %1357, %v1251
        %v1359 = vpop.permute.xlu0 %1358
        %1360 = vset.pattern.permute.xlu0 0
        %1361 = vperm.xlu0 %1360, %v1260
        %v1362 = vpop.permute.xlu0 %1361
        %1363 = vset.pattern.permute.xlu0 0
        %1364 = vperm.xlu0 %1363, %v1269
        %v1365 = vpop.permute.xlu0 %1364
        %v1366 = vperm.slane %v1272, %v485
        %v1367 = vadd.s32 %v485, 4294967288
        %v1368 = vperm.slane %v1275, %v1367
        %vm1369 = vcmask 130112
        %v1370 = vsel %vm1369, %v1368, %v1366
        %v1371 = vadd.s32 %v485, 4294967280
        %v1372 = vperm.slane %v1278, %v1371
        %vm1373 = vcmask 195712
        %v1374 = vsel %vm1373, %v1372, %v1370
        %v1375 = vadd.s32 %v485, 4294967272
        %v1376 = vperm.slane %v1281, %v1375
        %vm1377 = vcmask 261312
        %v1378 = vsel %vm1377, %v1376, %v1374
        %v1379 = vadd.s32 %v485, 4294967264
        %v1380 = vperm.slane %v1284, %v1379
        %vm1381 = vcmask 326912
        %v1382 = vsel %vm1381, %v1380, %v1378
        %v1383 = vadd.s32 %v485, 4294967256
        %v1384 = vperm.slane %v1287, %v1383
        %vm1385 = vcmask 392512
        %v1386 = vsel %vm1385, %v1384, %v1382
        %v1387 = vadd.s32 %v485, 4294967248
        %v1388 = vperm.slane %v1290, %v1387
        %vm1389 = vcmask 458112
        %v1390 = vsel %vm1389, %v1388, %v1386
        %v1391 = vadd.s32 %v485, 4294967240
        %v1392 = vperm.slane %v1293, %v1391
        %vm1393 = vcmask 523712
        %v1394 = vsel %vm1393, %v1392, %v1390
        %v1395 = vadd.s32 %v485, 4294967232
        %v1396 = vperm.slane %v1296, %v1395
        %vm1397 = vcmask 589312
        %v1398 = vsel %vm1397, %v1396, %v1394
        %v1399 = vadd.s32 %v485, 4294967224
        %v1400 = vperm.slane %v1299, %v1399
        %vm1401 = vcmask 654912
        %v1402 = vsel %vm1401, %v1400, %v1398
        %v1403 = vadd.s32 %v485, 4294967216
        %v1404 = vperm.slane %v1302, %v1403
        %vm1405 = vcmask 720512
        %v1406 = vsel %vm1405, %v1404, %v1402
        %v1407 = vadd.s32 %v485, 4294967208
        %v1408 = vperm.slane %v1305, %v1407
        %vm1409 = vcmask 786112
        %v1410 = vsel %vm1409, %v1408, %v1406
        %v1411 = vadd.s32 %v485, 4294967200
        %v1412 = vperm.slane %v1308, %v1411
        %vm1413 = vcmask 851712
        %v1414 = vsel %vm1413, %v1412, %v1410
        %v1415 = vadd.s32 %v485, 4294967192
        %v1416 = vperm.slane %v1311, %v1415
        %vm1417 = vcmask 917312
        %v1418 = vsel %vm1417, %v1416, %v1414
        %v1419 = vadd.s32 %v485, 4294967184
        %v1420 = vperm.slane %v1314, %v1419
        %vm1421 = vcmask 982912
        %v1422 = vsel %vm1421, %v1420, %v1418
        %v1423 = vadd.s32 %v485, 4294967176
        %v1424 = vperm.slane %v1317, %v1423
        %vm1425 = vcmask 1048512
        %v1426 = vsel %vm1425, %v1424, %v1422
        %v1427 = vperm.slane %v1320, %v485
        %v1428 = vperm.slane %v1323, %v1367
        %v1429 = vsel %vm1369, %v1428, %v1427
        %v1430 = vperm.slane %v1326, %v1371
        %v1431 = vsel %vm1373, %v1430, %v1429
        %v1432 = vperm.slane %v1329, %v1375
        %v1433 = vsel %vm1377, %v1432, %v1431
        %v1434 = vperm.slane %v1332, %v1379
        %v1435 = vsel %vm1381, %v1434, %v1433
        %v1436 = vperm.slane %v1335, %v1383
        %v1437 = vsel %vm1385, %v1436, %v1435
        %v1438 = vperm.slane %v1338, %v1387
        %v1439 = vsel %vm1389, %v1438, %v1437
        %v1440 = vperm.slane %v1341, %v1391
        %v1441 = vsel %vm1393, %v1440, %v1439
        %v1442 = vperm.slane %v1344, %v1395
        %v1443 = vsel %vm1397, %v1442, %v1441
        %v1444 = vperm.slane %v1347, %v1399
        %v1445 = vsel %vm1401, %v1444, %v1443
        %v1446 = vperm.slane %v1350, %v1403
        %v1447 = vsel %vm1405, %v1446, %v1445
        %v1448 = vperm.slane %v1353, %v1407
        %v1449 = vsel %vm1409, %v1448, %v1447
        %v1450 = vperm.slane %v1356, %v1411
        %v1451 = vsel %vm1413, %v1450, %v1449
        %v1452 = vperm.slane %v1359, %v1415
        %v1453 = vsel %vm1417, %v1452, %v1451
        %v1454 = vperm.slane %v1362, %v1419
        %v1455 = vsel %vm1421, %v1454, %v1453
        %v1456 = vperm.slane %v1365, %v1423
        %v1457 = vsel %vm1425, %v1456, %v1455
        %v1458 = vrot.slane %v1457, 7
        %vm1459 = vcmask 1040384
        %v1460 = vsel %vm1459, %v1426, %v1458
        %v1462 = vlaneseq
        %vm1463 = vcmp.ge.s32.totalorder %v1462, 0
        %vm1464 = vcmp.lt.s32.totalorder %v1462, 256
        %vm1465 = vmand %vm1463, %vm1464
        %1466 = vst.msk [vmem:[%s238] sm:$0x3] %vm1465, %v1460
        %s1467 = sand.u32 %s117, 1
        %s1468 = scalar_lea.sflag [#allocation5], %s1467
        %s1469 = sand.u32 %s117, 1
        %s1470 = smul.addr %s1469, 2
        %s1471 = scalar_lea.vmem [#allocation8], %s1470
        // Predicated region
        $region41: #{tpu_custom_call.1} parent=31 // pred_check
          %p1472 = pneg %p127
        $region42: #{tpu_custom_call.1} parent=31 // pred_check_branch
          %1474 = sbr.rel (%p1472) target = $region44
        $region43: #{tpu_custom_call.1} parent=31 // pred_region
          %s1475 = smul.u32 2, %s26
          %s1476 = ssub.s32 3, %s1475
          %p1477 = scmp.lt.s32.totalorder %s1476, 2
          %s1478 = scalar_select %p1477, %s1476, 2
          %s1479 = ssub.s32 2, %s1478
          %s1480 = sshll.u32 %s1479, 4
          %1481 = vsyncadd %s1468, %s1480
          %p1482 = scmp.ne.s32.totalorder 0, %s1478
          %s1483 = scalar_lea.hbm %s3, %s1475
          %s1484 = sshll.u32 %s1478, 4
          %s1485 = sshll.u32 %s1471, 4
          %s1486 = int_to_ptr.vmem [resolvable:$true] %s1485
          %s1487 = sshll.u32 %s1483, 4
          %s1488 = int_to_ptr.hbm [resolvable:$true] %s1487
          %1490 = dma.vmem_to_hbm [thread:$0]  (%p1482), %s1486, %s1484, %s1488, %s1468
        $region44: #{tpu_custom_call.1} parent=31 // pred_fallthru
          _
      $region32: #{tpu_custom_call.1} parent=5 // pred_fallthru
        _
      %p1491 = scmp.le.s32.totalorder 2, %s17
      // Predicated region
      $region45: #{tpu_custom_call.1} parent=5 // pred_check
        %p1492 = pneg %p1491
      $region46: #{tpu_custom_call.1} parent=5 // pred_check_branch
        %1494 = sbr.rel (%p1492) target = $region48
      $region47: #{tpu_custom_call.1} parent=5 // pred_region
        %s1495 = ssub.s32 %s17, 2
        // Predicated region
        $region49: #{tpu_custom_call.1} parent=47 // pred_check
          %p1496 = pneg %p133
        $region50: #{tpu_custom_call.1} parent=47 // pred_check_branch
          %1498 = sbr.rel (%p1496) target = $region52
        $region51: #{tpu_custom_call.1} parent=47 // pred_region
          %s1499 = sand.u32 %s118, 1
          %s1500 = scalar_lea.sflag [#allocation5], %s1499
          %s1501 = sand.u32 %s118, 1
          %s1502 = smul.addr %s1501, 2
          %s1503 = scalar_lea.vmem [#allocation8], %s1502
          %1505 = dma.done %s1500, 32
        $region52: #{tpu_custom_call.1} parent=47 // pred_fallthru
          _
      $region48: #{tpu_custom_call.1} parent=5 // pred_fallthru
        _
    $region6: #{tpu_custom_call.1} parent=1 // loop_footer
      %s21 = sadd.s32 1, %s17
    $region7: #{tpu_custom_call.1} parent=1 // loop_footer_branch
      %16 = sbr.rel target = $region3
    $region8: #{tpu_custom_call.1} parent=1 // loop_exit
      _
    %1506 = vsyncpa [#allocation4], 1
    %s1507 = scalar_lea.sflag [#allocation4], 1
    %1508 = vsyncpa %s1507, 1
    %1509 = vsyncpa [#allocation7], 1
    %1510 = vsyncpa [#allocation5], 1
    %s1511 = scalar_lea.sflag [#allocation5], 1
    %1512 = vsyncpa %s1511, 1

</llo_original>
